<compile_context>
chip_gen: v7x
topology: tpu7x:2x2x1
jax: 0.10.0
libtpu: 0.0.40
codegen_flags: <defaults>
</compile_context>

<pallas_src>
import collections
import functools
import math

import jax
import jax.numpy as jnp
import numpy as np
from jax import lax
from jax.experimental import pallas as pl
from jax.experimental.pallas import tpu as pltpu


# ----------------------------------------------------------------------------
# Layout helpers
# ----------------------------------------------------------------------------

def _round_up(n, m):
    return ((n + m - 1) // m) * m


def _vmem():
    return pl.BlockSpec(memory_space=pltpu.MemorySpace.VMEM)


def _smem():
    return pl.BlockSpec(memory_space=pltpu.MemorySpace.SMEM)


_Layout = collections.namedtuple(
    "_Layout",
    ["w_dec", "w_1a", "w_1b", "w_zz", "w_hr", "wf_cols",
     "w_2", "w_aar", "wa_rows", "wa_cols",
     "b_dec", "b_fc", "b_1", "b_2", "b_ar", "b_hr", "bias_cols"])


def _layout(F, H1, A, CWW):
    # wf slab: matrices whose contraction (row) dim is F.  Decoder first so its
    # 256-wide block is lane-aligned.
    w_dec = 0
    w_1a = CWW
    w_1b = w_1a + H1
    w_zz = w_1b + H1                 # [apply_z | regress_z]  width 2F
    w_hr = w_zz + 2 * F              # [applicable | regressable] width 2A
    wf_cols = _round_up(w_hr + 2 * A, 128)
    # wa slab: matrices whose contraction dim is H1 or A.
    w_2 = 0                          # action fc2 (H1, A)
    w_aar = A                        # [apply_a | regress_a]  (A, 2F)
    wa_rows = max(H1, A)
    wa_cols = _round_up(A + 2 * F, 128)
    # bias slab (1, bias_cols), decoder bias first (lane aligned).
    b_dec = 0
    b_fc = CWW
    b_1 = b_fc + F
    b_2 = b_1 + H1
    b_ar = b_2 + A                   # [apply_b | regress_b] width 2F
    b_hr = b_ar + 2 * F              # [applicable_b | regressable_b] width 2A
    bias_cols = _round_up(b_hr + 2 * A, 128)
    return _Layout(w_dec, w_1a, w_1b, w_zz, w_hr, wf_cols,
                   w_2, w_aar, wa_rows, wa_cols,
                   b_dec, b_fc, b_1, b_2, b_ar, b_hr, bias_cols)


# ----------------------------------------------------------------------------
# Fused Pallas kernel (entire forward pass, single pallas_call)
# ----------------------------------------------------------------------------

def _fused_forward_kernel(
    patches_ref,   # (Ckk, Bp2, Ppad)       f32  VMEM  im2col taps of [x_0;x_1]
    conv_ref,      # (C*Ckk + C,)           f32  SMEM  conv weights + bias
    tau_ref,       # (1,)                   f32  SMEM  inverse temperature
    wfc_ref,       # (C, Ppad, F)           bf16 VMEM  encoder fc weight
    wf_ref,        # (F, wf_cols)           bf16 VMEM  F-row weight slab
    wa_ref,        # (wa_rows, wa_cols)     bf16 VMEM  H1/A-row weight slab
    bias_ref,      # (1, bias_cols)         f32  VMEM  packed biases
    small_ref,     # (B, small_cols)        f32  VMEM  packed small outputs
    dec_ref,       # (4B, CWW)              f32  VMEM  stacked decoder output
    *, B, C, ckk, F, H1, A, CWW):
    f32 = jnp.float32
    bf16 = jnp.bfloat16
    Bp2 = patches_ref.shape[1]
    P = patches_ref.shape[2]
    lay = _layout(F, H1, A, CWW)
    inv_tau = tau_ref[0]

    # ---- Encoder on padded stacked frames [x_0 ; x_1] --------------------
    # VPU stencil over im2col taps (scalar weights from SMEM), then per-output
    # channel bf16 MXU dot against the fc weight (PyTorch flatten order).
    bfc = bias_ref[:, lay.b_fc:lay.b_fc + F]
    acc = jnp.zeros((Bp2, F), f32) + bfc
    # TODO(synk): for large C / ckk switch to lax.fori_loop(unroll=True) to
    # bound vreg live ranges; static unrolled loops are fine at C=1.
    for cout in range(C):
        hc = jnp.zeros((Bp2, P), f32)
        for q in range(ckk):
            hc = hc + patches_ref[q] * conv_ref[cout * ckk + q]
        hc = jnp.maximum(hc + conv_ref[C * ckk + cout], 0.0)
        acc = acc + jnp.dot(hc.astype(bf16), wfc_ref[cout],
                            preferred_element_type=f32)

    # BinaryConcrete (deterministic relaxation): sigmoid(l / tau)
    # TODO(synk): logistic noise of the stochastic BinaryConcrete omitted.
    z_full = jax.nn.sigmoid(acc * inv_tau)
    l0 = acc[:B]
    l1 = acc[B:2 * B]
    z01 = z_full[:2 * B]             # [z_0 ; z_1]
    z0 = z01[:B]
    z1 = z01[B:]

    # ---- Action MLP: relu([l0|l1] @ W1 + b1) @ W2 + b2 (W1 split by rows) -
    w1a = wf_ref[:, lay.w_1a:lay.w_1a + H1]
    w1b = wf_ref[:, lay.w_1b:lay.w_1b + H1]
    b1 = bias_ref[:, lay.b_1:lay.b_1 + H1]
    ah = jnp.maximum(
        jnp.dot(l0.astype(bf16), w1a, preferred_element_type=f32)
        + jnp.dot(l1.astype(bf16), w1b, preferred_element_type=f32)
        + b1, 0.0)
    w2 = wa_ref[0:H1, lay.w_2:lay.w_2 + A]
    b2 = bias_ref[:, lay.b_2:lay.b_2 + A]
    al = jnp.dot(ah.astype(bf16), w2, preferred_element_type=f32) + b2

    # GumbelSoftmax (deterministic relaxation): softmax(a_l / tau)
    # TODO(synk): Gumbel noise sampling omitted (eval-mode behaviour).
    s = al * inv_tau
    s = s - jnp.max(s, axis=-1, keepdims=True)
    e = jnp.exp(s)
    a = e * pl.reciprocal(jnp.sum(e, axis=-1, keepdims=True), approx=True)

    # ---- Apply + Regress fused: Linear(cat(a, z)) with row-split weights --
    # a-contribution for both heads in one dot, z-contribution in one dot.
    waar = wa_ref[0:A, lay.w_aar:lay.w_aar + 2 * F]      # [apply_a | regress_a]
    wzz = wf_ref[:, lay.w_zz:lay.w_zz + 2 * F]           # [apply_z | regress_z]
    b_ar = bias_ref[:, lay.b_ar:lay.b_ar + 2 * F]        # [apply_b | regress_b]
    pa = jnp.dot(a.astype(bf16), waar, preferred_element_type=f32)    # (B, 2F)
    pz = jnp.dot(z01.astype(bf16), wzz, preferred_element_type=f32)   # (2B, 2F)
    l2 = pa[:, :F] + pz[:B, :F] + b_ar[:, :F]
    l3 = pa[:, F:] + pz[B:, F:] + b_ar[:, F:]
    z2 = jax.nn.sigmoid(l2 * inv_tau)
    z3 = jax.nn.sigmoid(l3 * inv_tau)

    # ---- Applicable / Regressable heads fused into one dot ----------------
    whr = wf_ref[:, lay.w_hr:lay.w_hr + 2 * A]
    bhr = bias_ref[:, lay.b_hr:lay.b_hr + 2 * A]
    hr = jnp.dot(z01.astype(bf16), whr, preferred_element_type=f32) + bhr
    app = jax.nn.sigmoid(hr[:B, :A])
    reg = jax.nn.sigmoid(hr[B:, A:])

    # ---- Decoder: one stacked dot over [z_0 ; z_1 ; z_2 ; z_3] -------------
    wdec = wf_ref[:, lay.w_dec:lay.w_dec + CWW]
    bdec = bias_ref[:, lay.b_dec:lay.b_dec + CWW]
    zcat = jnp.concatenate([z01, z2, z3], axis=0)        # (4B, F)
    dec_ref[...] = jax.nn.sigmoid(
        jnp.dot(zcat.astype(bf16), wdec, preferred_element_type=f32) + bdec)

    # ---- Packed small outputs: single lane-dense store ---------------------
    small = jnp.concatenate(
        [l0, l1, z0, z1, l2, l3, z2, z3, al, a, app, reg], axis=-1)
    pad = small_ref.shape[1] - small.shape[1]
    if pad:
        small = jnp.pad(small, ((0, 0), (0, pad)))
    small_ref[...] = small


def fused_forward(packed, patches, inv_tau, *, batch, channels, img_width,
                  kernel, fluents, action_h1, action):
    B, C, W, k = batch, channels, img_width, kernel
    F, H1, A = fluents, action_h1, action
    cww = C * W * W
    ckk = C * k * k
    small_cols = _round_up(8 * F + 4 * A, 128)
    kern = functools.partial(_fused_forward_kernel, B=B, C=C, ckk=ckk,
                             F=F, H1=H1, A=A, CWW=cww)
    out_shape = (
        jax.ShapeDtypeStruct((B, small_cols), jnp.float32),   # packed small
        jax.ShapeDtypeStruct((4 * B, cww), jnp.float32),       # stacked decoder
    )
    in_specs = [
        _vmem(),   # patches
        _smem(),   # conv scalars
        _smem(),   # inv_tau
        _vmem(),   # wfc
        _vmem(),   # wf slab
        _vmem(),   # wa slab
        _vmem(),   # bias slab
    ]
    return pl.pallas_call(
        kern,
        out_shape=out_shape,
        in_specs=in_specs,
        out_specs=(_vmem(), _vmem()),
        compiler_params=pltpu.CompilerParams(
            vmem_limit_bytes=16 * 1024 * 1024),
    )(patches, packed["conv"], inv_tau, packed["wfc"], packed["wf"],
      packed["wa"], packed["bias"])


# ----------------------------------------------------------------------------
# Parameters (canonical PyTorch-shaped) and kernel-ready packing
# ----------------------------------------------------------------------------

def init_params(key, img_width, kernel, channels, fluents, action_h1, action):
    w, k, c, f, h1, a = img_width, kernel, channels, fluents, action_h1, action
    ho = w - k + 1
    keys = jax.random.split(key, 9)

    def dense(kk, fan_in, fan_out):
        scale = 1.0 / math.sqrt(fan_in)
        return (jax.random.normal(kk, (fan_in, fan_out), jnp.float32) * scale,
                jnp.zeros((fan_out,), jnp.float32))

    p = {}
    p["enc_conv_w"] = (jax.random.normal(keys[0], (c, c, k, k), jnp.float32)
                       * (1.0 / math.sqrt(c * k * k)))          # OIHW
    p["enc_conv_b"] = jnp.zeros((c,), jnp.float32)
    p["enc_fc_w"], p["enc_fc_b"] = dense(keys[1], c * ho * ho, f)
    p["dec_w"], p["dec_b"] = dense(keys[2], f, c * w * w)
    p["act1_w"], p["act1_b"] = dense(keys[3], 2 * f, h1)
    p["act2_w"], p["act2_b"] = dense(keys[4], h1, a)
    p["apply_w"], p["apply_b"] = dense(keys[5], a + f, f)
    p["regress_w"], p["regress_b"] = dense(keys[6], a + f, f)
    p["applicable_w"], p["applicable_b"] = dense(keys[7], f, a)
    p["regressable_w"], p["regressable_b"] = dense(keys[8], f, a)
    return p


def pack_params(p, img_width, kernel, channels, fluents, action_h1, action):
    """One-time reshape/split of the canonical params into kernel layout."""
    w, k, c = img_width, kernel, channels
    f, h1, a = fluents, action_h1, action
    ho = w - k + 1
    p_raw = ho * ho
    p_pad = _round_up(p_raw, 128)
    cww = c * w * w
    lay = _layout(f, h1, a, cww)
    bf16 = jnp.bfloat16

    q = {}
    # SMEM scalars: flattened conv weight (cout, cin, kh, kw) then conv bias.
    q["conv"] = jnp.concatenate(
        [p["enc_conv_w"].reshape(-1), p["enc_conv_b"]]).astype(jnp.float32)

    # Encoder fc weight in PyTorch flatten order, K padded to lane multiple.
    wfc = p["enc_fc_w"].reshape(c, p_raw, f)
    wfc = jnp.pad(wfc, ((0, 0), (0, p_pad - p_raw), (0, 0)))
    q["wfc"] = wfc.astype(bf16)

    # F-row weight slab.
    wf = jnp.zeros((f, lay.wf_cols), jnp.float32)
    wf = wf.at[:, lay.w_dec:lay.w_dec + cww].set(p["dec_w"])
    wf = wf.at[:, lay.w_1a:lay.w_1a + h1].set(p["act1_w"][:f])
    wf = wf.at[:, lay.w_1b:lay.w_1b + h1].set(p["act1_w"][f:])
    wf = wf.at[:, lay.w_zz:lay.w_zz + f].set(p["apply_w"][a:])
    wf = wf.at[:, lay.w_zz + f:lay.w_zz + 2 * f].set(p["regress_w"][a:])
    wf = wf.at[:, lay.w_hr:lay.w_hr + a].set(p["applicable_w"])
    wf = wf.at[:, lay.w_hr + a:lay.w_hr + 2 * a].set(p["regressable_w"])
    q["wf"] = wf.astype(bf16)

    # H1/A-row weight slab.
    wa = jnp.zeros((lay.wa_rows, lay.wa_cols), jnp.float32)
    wa = wa.at[:h1, lay.w_2:lay.w_2 + a].set(p["act2_w"])
    wa = wa.at[:a, lay.w_aar:lay.w_aar + f].set(p["apply_w"][:a])
    wa = wa.at[:a, lay.w_aar + f:lay.w_aar + 2 * f].set(p["regress_w"][:a])
    q["wa"] = wa.astype(bf16)

    # Bias slab (f32).
    bias = jnp.zeros((1, lay.bias_cols), jnp.float32)
    bias = bias.at[0, lay.b_dec:lay.b_dec + cww].set(p["dec_b"])
    bias = bias.at[0, lay.b_fc:lay.b_fc + f].set(p["enc_fc_b"])
    bias = bias.at[0, lay.b_1:lay.b_1 + h1].set(p["act1_b"])
    bias = bias.at[0, lay.b_2:lay.b_2 + a].set(p["act2_b"])
    bias = bias.at[0, lay.b_ar:lay.b_ar + f].set(p["apply_b"])
    bias = bias.at[0, lay.b_ar + f:lay.b_ar + 2 * f].set(p["regress_b"])
    bias = bias.at[0, lay.b_hr:lay.b_hr + a].set(p["applicable_b"])
    bias = bias.at[0, lay.b_hr + a:lay.b_hr + 2 * a].set(p["regressable_b"])
    q["bias"] = bias
    return q


# ----------------------------------------------------------------------------
# Forward wrapper (only layout plumbing lives outside the kernel)
# ----------------------------------------------------------------------------

def _im2col_taps(x01, k):
    """x01: (2B, C, W, W) -> (C*k*k, 2B, Ho*Ho) im2col taps (ci, kh, kw order)."""
    n, c, w, _ = x01.shape
    ho = w - k + 1
    taps = []
    for ci in range(c):
        for di in range(k):
            for dj in range(k):
                taps.append(x01[:, ci, di:di + ho, dj:dj + ho]
                            .reshape(n, ho * ho))
    return jnp.stack(taps, axis=0)


def forward(packed, x, epoch, *, img_width, kernel, channels, fluents,
            action_h1, action):
    B = x.shape[0]
    F, A = fluents, action
    c, w = channels, img_width

    # Annealed relaxation temperature.  epoch is a TRACED argument so changing
    # it does NOT trigger a recompile; inv_tau rides into the kernel via SMEM.
    epoch_f = jnp.asarray(epoch, jnp.float32)
    tau = jnp.maximum(0.5, 5.0 * jnp.exp(-0.01 * epoch_f))
    inv_tau = (1.0 / tau).reshape(1).astype(jnp.float32)

    x0 = x[:, 0].astype(jnp.float32)
    x1 = x[:, 1].astype(jnp.float32)
    x01 = jnp.concatenate([x0, x1], axis=0)               # (2B, C, W, W)
    patches = _im2col_taps(x01, kernel)                   # (Ckk, 2B, Ho*Ho)
    ckk, two_b, p_raw = patches.shape
    bp2 = _round_up(two_b, 8)
    p_pad = _round_up(p_raw, 128)
    patches = jnp.pad(patches,
                      ((0, 0), (0, bp2 - two_b), (0, p_pad - p_raw)))

    small, dec = fused_forward(
        packed, patches, inv_tau, batch=B, channels=channels,
        img_width=img_width, kernel=kernel, fluents=fluents,
        action_h1=action_h1, action=action)

    def sl(off, width):
        return small[:, off:off + width]

    out = {
        "x_0": x0, "x_1": x1,
        "l_0": sl(0 * F, F), "l_1": sl(1 * F, F),
        "z_0": sl(2 * F, F), "z_1": sl(3 * F, F),
        "l_2": sl(4 * F, F), "l_3": sl(5 * F, F),
        "z_2": sl(6 * F, F), "z_3": sl(7 * F, F),
        "a_l": sl(8 * F, A), "a": sl(8 * F + A, A),
        "app": sl(8 * F + 2 * A, A), "reg": sl(8 * F + 3 * A, A),
        "x_dec_0": dec[0 * B:1 * B].reshape(B, c, w, w),
        "x_dec_1": dec[1 * B:2 * B].reshape(B, c, w, w),
        "x_aae_2": dec[2 * B:3 * B].reshape(B, c, w, w),
        "x_aae_3": dec[3 * B:4 * B].reshape(B, c, w, w),
    }
    return out


forward_jit = jax.jit(
    forward,
    static_argnames=("img_width", "kernel", "channels", "fluents",
                     "action_h1", "action"))


# ----------------------------------------------------------------------------
# Plain-JAX reference (bf16-dot matched; for numerical verification only)
# ----------------------------------------------------------------------------

def reference_forward(params, x, epoch, *, img_width, kernel, channels,
                      fluents):
    del kernel, fluents
    tau = max(0.5, 5.0 * math.exp(-0.01 * float(epoch)))
    hp = jax.lax.Precision.HIGHEST
    bf16 = jnp.bfloat16

    def bdot(h, w):
        return jnp.dot(h.astype(bf16), w.astype(bf16),
                       preferred_element_type=jnp.float32)

    x0 = x[:, 0].astype(jnp.float32)
    x1 = x[:, 1].astype(jnp.float32)

    def enc(img):
        y = lax.conv_general_dilated(
            img, params["enc_conv_w"], (1, 1), "VALID",
            dimension_numbers=("NCHW", "OIHW", "NCHW"), precision=hp)
        y = jnp.maximum(y + params["enc_conv_b"].reshape(1, -1, 1, 1), 0.0)
        h = y.reshape(img.shape[0], -1)
        return bdot(h, params["enc_fc_w"]) + params["enc_fc_b"]

    def dec(z):
        y = jax.nn.sigmoid(bdot(z, params["dec_w"]) + params["dec_b"])
        return y.reshape(z.shape[0], channels, img_width, img_width)

    out = {"x_0": x0, "x_1": x1}
    out["l_0"], out["l_1"] = enc(x0), enc(x1)
    out["z_0"] = jax.nn.sigmoid(out["l_0"] / tau)
    out["z_1"] = jax.nn.sigmoid(out["l_1"] / tau)
    a_in = jnp.concatenate([out["l_0"], out["l_1"]], axis=1)
    ah = jnp.maximum(bdot(a_in, params["act1_w"]) + params["act1_b"], 0.0)
    out["a_l"] = bdot(ah, params["act2_w"]) + params["act2_b"]
    out["a"] = jax.nn.softmax(out["a_l"] / tau, axis=-1)
    out["l_2"] = (bdot(jnp.concatenate([out["a"], out["z_0"]], axis=1),
                       params["apply_w"]) + params["apply_b"])
    out["l_3"] = (bdot(jnp.concatenate([out["a"], out["z_1"]], axis=1),
                       params["regress_w"]) + params["regress_b"])
    out["z_2"] = jax.nn.sigmoid(out["l_2"] / tau)
    out["z_3"] = jax.nn.sigmoid(out["l_3"] / tau)
    out["x_dec_0"] = dec(out["z_0"])
    out["x_dec_1"] = dec(out["z_1"])
    out["x_aae_2"] = dec(out["z_2"])
    out["x_aae_3"] = dec(out["z_3"])
    out["app"] = jax.nn.sigmoid(bdot(out["z_0"], params["applicable_w"])
                                + params["applicable_b"])
    out["reg"] = jax.nn.sigmoid(bdot(out["z_1"], params["regressable_w"])
                                + params["regressable_b"])
    return out


# ----------------------------------------------------------------------------
# Demo
# ----------------------------------------------------------------------------

if __name__ == "__main__":
    img_width, kernel_size, channels = 16, 3, 1
    fluents, batch, action_h1, n_action = 32, 2, 32, 16
    epoch = 10

    key = jax.random.PRNGKey(0)
    pkey, xkey = jax.random.split(key)
    params = init_params(pkey, img_width, kernel_size, channels, fluents,
                         action_h1, n_action)
    packed = pack_params(params, img_width, kernel_size, channels, fluents,
                         action_h1, n_action)

    # x packs the pre/post state images: (B, 2, C, W, W) NCHW per frame.
    x = jax.random.normal(xkey, (batch, 2, channels, img_width, img_width),
                          jnp.float32)

    out = forward_jit(packed, x, epoch, img_width=img_width,
                      kernel=kernel_size, channels=channels, fluents=fluents,
                      action_h1=action_h1, action=n_action)
    jax.block_until_ready(out)

    # shape sanity
    assert out["z_0"].shape == (batch, fluents)
    assert out["a"].shape == (batch, n_action)
    assert out["x_dec_0"].shape == (batch, channels, img_width, img_width)
    assert out["app"].shape == (batch, n_action)

    # numerical check vs. plain-JAX reference (same bf16-on-MXU precision;
    # tolerance also covers the approx-reciprocal softmax denominator)
    ref = reference_forward(params, x, epoch, img_width=img_width,
                            kernel=kernel_size, channels=channels,
                            fluents=fluents)
    for name in ("l_0", "l_1", "z_0", "z_1", "a_l", "a", "l_2", "l_3",
                 "z_2", "z_3", "x_dec_0", "x_dec_1", "x_aae_2", "x_aae_3",
                 "app", "reg"):
        np.testing.assert_allclose(np.asarray(out[name]),
                                   np.asarray(ref[name]),
                                   rtol=1e-2, atol=1e-2)

    print("KERNEL_OK")
</pallas_src>

<mosaic_0001>
module attributes {stable_mosaic.version = 11 : i64} {
  func.func @_fused_forward_kernel(%arg0: memref<9x8x256xf32, #tpu.memory_space<vmem>>, %arg1: memref<10xf32, #tpu.memory_space<smem>>, %arg2: memref<1xf32, #tpu.memory_space<smem>>, %arg3: memref<1x256x32xbf16, #tpu.memory_space<vmem>>, %arg4: memref<32x512xbf16, #tpu.memory_space<vmem>>, %arg5: memref<32x128xbf16, #tpu.memory_space<vmem>>, %arg6: memref<1x512xf32, #tpu.memory_space<vmem>>, %arg7: memref<2x384xf32, #tpu.memory_space<vmem>>, %arg8: memref<8x256xf32, #tpu.memory_space<vmem>>) attributes {dimension_semantics = [], scalar_prefetch = 0 : i64, scratch_operands = 0 : i64, tpu.core_type = #tpu.core_type<tc>} {
    %c0 = arith.constant 0 : index
    %0 = memref.load %arg2[%c0] : memref<1xf32, #tpu.memory_space<smem>>
    %c0_0 = arith.constant 0 : index
    %c256 = arith.constant 256 : index
    %1 = vector.load %arg6[%c0_0, %c256] : memref<1x512xf32, #tpu.memory_space<vmem>>, vector<1x32xf32>
    %cst = arith.constant 0.000000e+00 : f32
    %2 = vector.broadcast %cst : f32 to vector<8x32xf32>
    %3 = vector.broadcast %1 : vector<1x32xf32> to vector<8x32xf32>
    %4 = arith.addf %2, %3 : vector<8x32xf32>
    %cst_1 = arith.constant 0.000000e+00 : f32
    %5 = vector.broadcast %cst_1 : f32 to vector<8x256xf32>
    %c0_2 = arith.constant 0 : index
    %c0_3 = arith.constant 0 : index
    %c0_4 = arith.constant 0 : index
    %6 = vector.load %arg0[%c0_2, %c0_3, %c0_4] : memref<9x8x256xf32, #tpu.memory_space<vmem>>, vector<1x8x256xf32>
    %7 = vector.shape_cast %6 : vector<1x8x256xf32> to vector<8x256xf32>
    %c0_5 = arith.constant 0 : index
    %8 = memref.load %arg1[%c0_5] : memref<10xf32, #tpu.memory_space<smem>>
    %9 = vector.broadcast %8 : f32 to vector<8x256xf32>
    %10 = arith.mulf %7, %9 : vector<8x256xf32>
    %11 = arith.addf %5, %10 : vector<8x256xf32>
    %c1 = arith.constant 1 : index
    %c0_6 = arith.constant 0 : index
    %c0_7 = arith.constant 0 : index
    %12 = vector.load %arg0[%c1, %c0_6, %c0_7] : memref<9x8x256xf32, #tpu.memory_space<vmem>>, vector<1x8x256xf32>
    %13 = vector.shape_cast %12 : vector<1x8x256xf32> to vector<8x256xf32>
    %c1_8 = arith.constant 1 : index
    %14 = memref.load %arg1[%c1_8] : memref<10xf32, #tpu.memory_space<smem>>
    %15 = vector.broadcast %14 : f32 to vector<8x256xf32>
    %16 = arith.mulf %13, %15 : vector<8x256xf32>
    %17 = arith.addf %11, %16 : vector<8x256xf32>
    %c2 = arith.constant 2 : index
    %c0_9 = arith.constant 0 : index
    %c0_10 = arith.constant 0 : index
    %18 = vector.load %arg0[%c2, %c0_9, %c0_10] : memref<9x8x256xf32, #tpu.memory_space<vmem>>, vector<1x8x256xf32>
    %19 = vector.shape_cast %18 : vector<1x8x256xf32> to vector<8x256xf32>
    %c2_11 = arith.constant 2 : index
    %20 = memref.load %arg1[%c2_11] : memref<10xf32, #tpu.memory_space<smem>>
    %21 = vector.broadcast %20 : f32 to vector<8x256xf32>
    %22 = arith.mulf %19, %21 : vector<8x256xf32>
    %23 = arith.addf %17, %22 : vector<8x256xf32>
    %c3 = arith.constant 3 : index
    %c0_12 = arith.constant 0 : index
    %c0_13 = arith.constant 0 : index
    %24 = vector.load %arg0[%c3, %c0_12, %c0_13] : memref<9x8x256xf32, #tpu.memory_space<vmem>>, vector<1x8x256xf32>
    %25 = vector.shape_cast %24 : vector<1x8x256xf32> to vector<8x256xf32>
    %c3_14 = arith.constant 3 : index
    %26 = memref.load %arg1[%c3_14] : memref<10xf32, #tpu.memory_space<smem>>
    %27 = vector.broadcast %26 : f32 to vector<8x256xf32>
    %28 = arith.mulf %25, %27 : vector<8x256xf32>
    %29 = arith.addf %23, %28 : vector<8x256xf32>
    %c4 = arith.constant 4 : index
    %c0_15 = arith.constant 0 : index
    %c0_16 = arith.constant 0 : index
    %30 = vector.load %arg0[%c4, %c0_15, %c0_16] : memref<9x8x256xf32, #tpu.memory_space<vmem>>, vector<1x8x256xf32>
    %31 = vector.shape_cast %30 : vector<1x8x256xf32> to vector<8x256xf32>
    %c4_17 = arith.constant 4 : index
    %32 = memref.load %arg1[%c4_17] : memref<10xf32, #tpu.memory_space<smem>>
    %33 = vector.broadcast %32 : f32 to vector<8x256xf32>
    %34 = arith.mulf %31, %33 : vector<8x256xf32>
    %35 = arith.addf %29, %34 : vector<8x256xf32>
    %c5 = arith.constant 5 : index
    %c0_18 = arith.constant 0 : index
    %c0_19 = arith.constant 0 : index
    %36 = vector.load %arg0[%c5, %c0_18, %c0_19] : memref<9x8x256xf32, #tpu.memory_space<vmem>>, vector<1x8x256xf32>
    %37 = vector.shape_cast %36 : vector<1x8x256xf32> to vector<8x256xf32>
    %c5_20 = arith.constant 5 : index
    %38 = memref.load %arg1[%c5_20] : memref<10xf32, #tpu.memory_space<smem>>
    %39 = vector.broadcast %38 : f32 to vector<8x256xf32>
    %40 = arith.mulf %37, %39 : vector<8x256xf32>
    %41 = arith.addf %35, %40 : vector<8x256xf32>
    %c6 = arith.constant 6 : index
    %c0_21 = arith.constant 0 : index
    %c0_22 = arith.constant 0 : index
    %42 = vector.load %arg0[%c6, %c0_21, %c0_22] : memref<9x8x256xf32, #tpu.memory_space<vmem>>, vector<1x8x256xf32>
    %43 = vector.shape_cast %42 : vector<1x8x256xf32> to vector<8x256xf32>
    %c6_23 = arith.constant 6 : index
    %44 = memref.load %arg1[%c6_23] : memref<10xf32, #tpu.memory_space<smem>>
    %45 = vector.broadcast %44 : f32 to vector<8x256xf32>
    %46 = arith.mulf %43, %45 : vector<8x256xf32>
    %47 = arith.addf %41, %46 : vector<8x256xf32>
    %c7 = arith.constant 7 : index
    %c0_24 = arith.constant 0 : index
    %c0_25 = arith.constant 0 : index
    %48 = vector.load %arg0[%c7, %c0_24, %c0_25] : memref<9x8x256xf32, #tpu.memory_space<vmem>>, vector<1x8x256xf32>
    %49 = vector.shape_cast %48 : vector<1x8x256xf32> to vector<8x256xf32>
    %c7_26 = arith.constant 7 : index
    %50 = memref.load %arg1[%c7_26] : memref<10xf32, #tpu.memory_space<smem>>
    %51 = vector.broadcast %50 : f32 to vector<8x256xf32>
    %52 = arith.mulf %49, %51 : vector<8x256xf32>
    %53 = arith.addf %47, %52 : vector<8x256xf32>
    %c8 = arith.constant 8 : index
    %c0_27 = arith.constant 0 : index
    %c0_28 = arith.constant 0 : index
    %54 = vector.load %arg0[%c8, %c0_27, %c0_28] : memref<9x8x256xf32, #tpu.memory_space<vmem>>, vector<1x8x256xf32>
    %55 = vector.shape_cast %54 : vector<1x8x256xf32> to vector<8x256xf32>
    %c8_29 = arith.constant 8 : index
    %56 = memref.load %arg1[%c8_29] : memref<10xf32, #tpu.memory_space<smem>>
    %57 = vector.broadcast %56 : f32 to vector<8x256xf32>
    %58 = arith.mulf %55, %57 : vector<8x256xf32>
    %59 = arith.addf %53, %58 : vector<8x256xf32>
    %c9 = arith.constant 9 : index
    %60 = memref.load %arg1[%c9] : memref<10xf32, #tpu.memory_space<smem>>
    %61 = vector.broadcast %60 : f32 to vector<8x256xf32>
    %62 = arith.addf %59, %61 : vector<8x256xf32>
    %cst_30 = arith.constant 0.000000e+00 : f32
    %63 = vector.broadcast %cst_30 : f32 to vector<8x256xf32>
    %64 = arith.maximumf %62, %63 : vector<8x256xf32>
    %65 = arith.truncf %64 : vector<8x256xf32> to vector<8x256xbf16>
    %c0_31 = arith.constant 0 : index
    %c0_32 = arith.constant 0 : index
    %c0_33 = arith.constant 0 : index
    %66 = vector.load %arg3[%c0_31, %c0_32, %c0_33] : memref<1x256x32xbf16, #tpu.memory_space<vmem>>, vector<1x256x32xbf16>
    %67 = vector.shape_cast %66 : vector<1x256x32xbf16> to vector<256x32xbf16>
    %cst_34 = arith.constant dense<0.000000e+00> : vector<8x32xf32>
    %68 = tpu.matmul %65, %67, %cst_34 {dimension_numbers = #tpu.dot_dimension_numbers<[1], [0], [0], [1], [0, 0, 1, 1], [], []>} : vector<8x256xbf16>, vector<256x32xbf16>, vector<8x32xf32> -> vector<8x32xf32>
    %69 = arith.addf %4, %68 : vector<8x32xf32>
    %70 = vector.broadcast %0 : f32 to vector<8x32xf32>
    %71 = arith.mulf %69, %70 : vector<8x32xf32>
    %72 = arith.negf %71 : vector<8x32xf32>
    %73 = math.exp %72 : vector<8x32xf32>
    %cst_35 = arith.constant 1.000000e+00 : f32
    %74 = vector.broadcast %cst_35 : f32 to vector<8x32xf32>
    %75 = arith.addf %74, %73 : vector<8x32xf32>
    %76 = arith.divf %74, %75 : vector<8x32xf32>
    %77 = vector.extract_strided_slice %69 {offsets = [0, 0], sizes = [2, 32], strides = [1, 1]} : vector<8x32xf32> to vector<2x32xf32>
    %78 = vector.extract_strided_slice %69 {offsets = [2, 0], sizes = [2, 32], strides = [1, 1]} : vector<8x32xf32> to vector<2x32xf32>
    %79 = vector.extract_strided_slice %76 {offsets = [0, 0], sizes = [4, 32], strides = [1, 1]} : vector<8x32xf32> to vector<4x32xf32>
    %80 = vector.extract_strided_slice %79 {offsets = [0, 0], sizes = [2, 32], strides = [1, 1]} : vector<4x32xf32> to vector<2x32xf32>
    %81 = vector.extract_strided_slice %79 {offsets = [2, 0], sizes = [2, 32], strides = [1, 1]} : vector<4x32xf32> to vector<2x32xf32>
    %c0_36 = arith.constant 0 : index
    %c256_37 = arith.constant 256 : index
    %82 = vector.load %arg4[%c0_36, %c256_37] : memref<32x512xbf16, #tpu.memory_space<vmem>>, vector<32x32xbf16>
    %c0_38 = arith.constant 0 : index
    %c288 = arith.constant 288 : index
    %83 = vector.load %arg4[%c0_38, %c288] : memref<32x512xbf16, #tpu.memory_space<vmem>>, vector<32x32xbf16>
    %c0_39 = arith.constant 0 : index
    %c288_40 = arith.constant 288 : index
    %84 = vector.load %arg6[%c0_39, %c288_40] : memref<1x512xf32, #tpu.memory_space<vmem>>, vector<1x32xf32>
    %85 = arith.truncf %77 : vector<2x32xf32> to vector<2x32xbf16>
    %cst_41 = arith.constant dense<0.000000e+00> : vector<2x32xf32>
    %86 = tpu.matmul %85, %82, %cst_41 {dimension_numbers = #tpu.dot_dimension_numbers<[1], [0], [0], [1], [0, 0, 1, 1], [], []>} : vector<2x32xbf16>, vector<32x32xbf16>, vector<2x32xf32> -> vector<2x32xf32>
    %87 = arith.truncf %78 : vector<2x32xf32> to vector<2x32xbf16>
    %cst_42 = arith.constant dense<0.000000e+00> : vector<2x32xf32>
    %88 = tpu.matmul %87, %83, %cst_42 {dimension_numbers = #tpu.dot_dimension_numbers<[1], [0], [0], [1], [0, 0, 1, 1], [], []>} : vector<2x32xbf16>, vector<32x32xbf16>, vector<2x32xf32> -> vector<2x32xf32>
    %89 = arith.addf %86, %88 : vector<2x32xf32>
    %90 = vector.broadcast %84 : vector<1x32xf32> to vector<2x32xf32>
    %91 = arith.addf %89, %90 : vector<2x32xf32>
    %cst_43 = arith.constant 0.000000e+00 : f32
    %92 = vector.broadcast %cst_43 : f32 to vector<2x32xf32>
    %93 = arith.maximumf %91, %92 : vector<2x32xf32>
    %c0_44 = arith.constant 0 : index
    %c0_45 = arith.constant 0 : index
    %94 = vector.load %arg5[%c0_44, %c0_45] : memref<32x128xbf16, #tpu.memory_space<vmem>>, vector<32x16xbf16>
    %c0_46 = arith.constant 0 : index
    %c320 = arith.constant 320 : index
    %95 = vector.load %arg6[%c0_46, %c320] : memref<1x512xf32, #tpu.memory_space<vmem>>, vector<1x16xf32>
    %96 = arith.truncf %93 : vector<2x32xf32> to vector<2x32xbf16>
    %cst_47 = arith.constant dense<0.000000e+00> : vector<2x16xf32>
    %97 = tpu.matmul %96, %94, %cst_47 {dimension_numbers = #tpu.dot_dimension_numbers<[1], [0], [0], [1], [0, 0, 1, 1], [], []>} : vector<2x32xbf16>, vector<32x16xbf16>, vector<2x16xf32> -> vector<2x16xf32>
    %98 = vector.broadcast %95 : vector<1x16xf32> to vector<2x16xf32>
    %99 = arith.addf %97, %98 : vector<2x16xf32>
    %100 = vector.broadcast %0 : f32 to vector<2x16xf32>
    %101 = arith.mulf %99, %100 : vector<2x16xf32>
    %cst_48 = arith.constant dense<0xFF800000> : vector<2xf32>
    %102 = vector.multi_reduction <maximumf>, %101, %cst_48 [1] : vector<2x16xf32> to vector<2xf32>
    %103 = vector.shape_cast %102 : vector<2xf32> to vector<2x1xf32>
    %104 = vector.broadcast %103 : vector<2x1xf32> to vector<2x16xf32>
    %105 = arith.subf %101, %104 : vector<2x16xf32>
    %106 = math.exp %105 : vector<2x16xf32>
    %cst_49 = arith.constant dense<0.000000e+00> : vector<2xf32>
    %107 = vector.multi_reduction <add>, %106, %cst_49 [1] : vector<2x16xf32> to vector<2xf32>
    %108 = vector.shape_cast %107 : vector<2xf32> to vector<2x1xf32>
    %109 = tpu.reciprocal %108 {approx = true} : vector<2x1xf32> -> vector<2x1xf32>
    %110 = vector.broadcast %109 : vector<2x1xf32> to vector<2x16xf32>
    %111 = arith.mulf %106, %110 : vector<2x16xf32>
    %c0_50 = arith.constant 0 : index
    %c16 = arith.constant 16 : index
    %112 = vector.load %arg5[%c0_50, %c16] : memref<32x128xbf16, #tpu.memory_space<vmem>>, vector<16x64xbf16>
    %c0_51 = arith.constant 0 : index
    %c320_52 = arith.constant 320 : index
    %113 = vector.load %arg4[%c0_51, %c320_52] : memref<32x512xbf16, #tpu.memory_space<vmem>>, vector<32x64xbf16>
    %c0_53 = arith.constant 0 : index
    %c336 = arith.constant 336 : index
    %114 = vector.load %arg6[%c0_53, %c336] : memref<1x512xf32, #tpu.memory_space<vmem>>, vector<1x64xf32>
    %115 = arith.truncf %111 : vector<2x16xf32> to vector<2x16xbf16>
    %cst_54 = arith.constant dense<0.000000e+00> : vector<2x64xf32>
    %116 = tpu.matmul %115, %112, %cst_54 {dimension_numbers = #tpu.dot_dimension_numbers<[1], [0], [0], [1], [0, 0, 1, 1], [], []>} : vector<2x16xbf16>, vector<16x64xbf16>, vector<2x64xf32> -> vector<2x64xf32>
    %117 = arith.truncf %79 : vector<4x32xf32> to vector<4x32xbf16>
    %cst_55 = arith.constant dense<0.000000e+00> : vector<4x64xf32>
    %118 = tpu.matmul %117, %113, %cst_55 {dimension_numbers = #tpu.dot_dimension_numbers<[1], [0], [0], [1], [0, 0, 1, 1], [], []>} : vector<4x32xbf16>, vector<32x64xbf16>, vector<4x64xf32> -> vector<4x64xf32>
    %119 = vector.extract_strided_slice %116 {offsets = [0, 0], sizes = [2, 32], strides = [1, 1]} : vector<2x64xf32> to vector<2x32xf32>
    %120 = vector.extract_strided_slice %118 {offsets = [0, 0], sizes = [2, 32], strides = [1, 1]} : vector<4x64xf32> to vector<2x32xf32>
    %121 = arith.addf %119, %120 : vector<2x32xf32>
    %122 = vector.extract_strided_slice %114 {offsets = [0, 0], sizes = [1, 32], strides = [1, 1]} : vector<1x64xf32> to vector<1x32xf32>
    %123 = vector.broadcast %122 : vector<1x32xf32> to vector<2x32xf32>
    %124 = arith.addf %121, %123 : vector<2x32xf32>
    %125 = vector.extract_strided_slice %116 {offsets = [0, 32], sizes = [2, 32], strides = [1, 1]} : vector<2x64xf32> to vector<2x32xf32>
    %126 = vector.extract_strided_slice %118 {offsets = [2, 32], sizes = [2, 32], strides = [1, 1]} : vector<4x64xf32> to vector<2x32xf32>
    %127 = arith.addf %125, %126 : vector<2x32xf32>
    %128 = vector.extract_strided_slice %114 {offsets = [0, 32], sizes = [1, 32], strides = [1, 1]} : vector<1x64xf32> to vector<1x32xf32>
    %129 = vector.broadcast %128 : vector<1x32xf32> to vector<2x32xf32>
    %130 = arith.addf %127, %129 : vector<2x32xf32>
    %131 = vector.broadcast %0 : f32 to vector<2x32xf32>
    %132 = arith.mulf %124, %131 : vector<2x32xf32>
    %133 = arith.negf %132 : vector<2x32xf32>
    %134 = math.exp %133 : vector<2x32xf32>
    %cst_56 = arith.constant 1.000000e+00 : f32
    %135 = vector.broadcast %cst_56 : f32 to vector<2x32xf32>
    %136 = arith.addf %135, %134 : vector<2x32xf32>
    %137 = arith.divf %135, %136 : vector<2x32xf32>
    %138 = vector.broadcast %0 : f32 to vector<2x32xf32>
    %139 = arith.mulf %130, %138 : vector<2x32xf32>
    %140 = arith.negf %139 : vector<2x32xf32>
    %141 = math.exp %140 : vector<2x32xf32>
    %cst_57 = arith.constant 1.000000e+00 : f32
    %142 = vector.broadcast %cst_57 : f32 to vector<2x32xf32>
    %143 = arith.addf %142, %141 : vector<2x32xf32>
    %144 = arith.divf %142, %143 : vector<2x32xf32>
    %c0_58 = arith.constant 0 : index
    %c384 = arith.constant 384 : index
    %145 = vector.load %arg4[%c0_58, %c384] : memref<32x512xbf16, #tpu.memory_space<vmem>>, vector<32x32xbf16>
    %c0_59 = arith.constant 0 : index
    %c400 = arith.constant 400 : index
    %146 = vector.load %arg6[%c0_59, %c400] : memref<1x512xf32, #tpu.memory_space<vmem>>, vector<1x32xf32>
    %147 = arith.truncf %79 : vector<4x32xf32> to vector<4x32xbf16>
    %cst_60 = arith.constant dense<0.000000e+00> : vector<4x32xf32>
    %148 = tpu.matmul %147, %145, %cst_60 {dimension_numbers = #tpu.dot_dimension_numbers<[1], [0], [0], [1], [0, 0, 1, 1], [], []>} : vector<4x32xbf16>, vector<32x32xbf16>, vector<4x32xf32> -> vector<4x32xf32>
    %149 = vector.broadcast %146 : vector<1x32xf32> to vector<4x32xf32>
    %150 = arith.addf %148, %149 : vector<4x32xf32>
    %151 = vector.extract_strided_slice %150 {offsets = [0, 0], sizes = [2, 16], strides = [1, 1]} : vector<4x32xf32> to vector<2x16xf32>
    %152 = arith.negf %151 : vector<2x16xf32>
    %153 = math.exp %152 : vector<2x16xf32>
    %cst_61 = arith.constant 1.000000e+00 : f32
    %154 = vector.broadcast %cst_61 : f32 to vector<2x16xf32>
    %155 = arith.addf %154, %153 : vector<2x16xf32>
    %156 = arith.divf %154, %155 : vector<2x16xf32>
    %157 = vector.extract_strided_slice %150 {offsets = [2, 16], sizes = [2, 16], strides = [1, 1]} : vector<4x32xf32> to vector<2x16xf32>
    %158 = arith.negf %157 : vector<2x16xf32>
    %159 = math.exp %158 : vector<2x16xf32>
    %cst_62 = arith.constant 1.000000e+00 : f32
    %160 = vector.broadcast %cst_62 : f32 to vector<2x16xf32>
    %161 = arith.addf %160, %159 : vector<2x16xf32>
    %162 = arith.divf %160, %161 : vector<2x16xf32>
    %c0_63 = arith.constant 0 : index
    %c0_64 = arith.constant 0 : index
    %163 = vector.load %arg4[%c0_63, %c0_64] : memref<32x512xbf16, #tpu.memory_space<vmem>>, vector<32x256xbf16>
    %c0_65 = arith.constant 0 : index
    %c0_66 = arith.constant 0 : index
    %164 = vector.load %arg6[%c0_65, %c0_66] : memref<1x512xf32, #tpu.memory_space<vmem>>, vector<1x256xf32>
    %165 = tpu.concatenate %79, %137, %144 in 0 : vector<4x32xf32>, vector<2x32xf32>, vector<2x32xf32> -> vector<8x32xf32>
    %166 = arith.truncf %165 : vector<8x32xf32> to vector<8x32xbf16>
    %cst_67 = arith.constant dense<0.000000e+00> : vector<8x256xf32>
    %167 = tpu.matmul %166, %163, %cst_67 {dimension_numbers = #tpu.dot_dimension_numbers<[1], [0], [0], [1], [0, 0, 1, 1], [], []>} : vector<8x32xbf16>, vector<32x256xbf16>, vector<8x256xf32> -> vector<8x256xf32>
    %168 = vector.broadcast %164 : vector<1x256xf32> to vector<8x256xf32>
    %169 = arith.addf %167, %168 : vector<8x256xf32>
    %170 = arith.negf %169 : vector<8x256xf32>
    %171 = math.exp %170 : vector<8x256xf32>
    %cst_68 = arith.constant 1.000000e+00 : f32
    %172 = vector.broadcast %cst_68 : f32 to vector<8x256xf32>
    %173 = arith.addf %172, %171 : vector<8x256xf32>
    %174 = arith.divf %172, %173 : vector<8x256xf32>
    %c0_69 = arith.constant 0 : index
    %c0_70 = arith.constant 0 : index
    %175 = vector.load %arg8[%c0_69, %c0_70] : memref<8x256xf32, #tpu.memory_space<vmem>>, vector<8x256xf32>
    tpu.vector_store %arg8[%c0_69, %c0_70], %174 {strides = array<i32>} : memref<8x256xf32, #tpu.memory_space<vmem>>, vector<8x256xf32>,
    %176 = tpu.concatenate %77, %78, %80, %81, %124, %130, %137, %144, %99, %111, %156, %162 in 1 : vector<2x32xf32>, vector<2x32xf32>, vector<2x32xf32>, vector<2x32xf32>, vector<2x32xf32>, vector<2x32xf32>, vector<2x32xf32>, vector<2x32xf32>, vector<2x16xf32>, vector<2x16xf32>, vector<2x16xf32>, vector<2x16xf32> -> vector<2x320xf32>
    %c0_i32 = arith.constant 0 : i32
    %177 = arith.sitofp %c0_i32 : i32 to f32
    %178 = vector.broadcast %177 : f32 to vector<2x64xf32>
    %179 = tpu.concatenate %176, %178 in 1 : vector<2x320xf32>, vector<2x64xf32> -> vector<2x384xf32>
    %c0_71 = arith.constant 0 : index
    %c0_72 = arith.constant 0 : index
    %180 = vector.load %arg7[%c0_71, %c0_72] : memref<2x384xf32, #tpu.memory_space<vmem>>, vector<2x384xf32>
    tpu.vector_store %arg7[%c0_71, %c0_72], %179 {strides = array<i32>} : memref<2x384xf32, #tpu.memory_space<vmem>>, vector<2x384xf32>,
    return
  }
}

</mosaic_0001>

<llo_original>
// kernel: squeeze.13
$region0: #{squeeze.13}
  %s0 = inlined_call_operand.vmem [shape: f32[4,1,14,14], index: 0, kind: input, shape index: {}]
  %s1 = inlined_call_operand.vmem [shape: f32[1,4,196], index: 1, kind: output, shape index: {}]
  $region1: #{squeeze.13} parent=0
    #allocation0 [shape = 'u8[8192]{0}', space=vmem, size = 0x2000, scoped, tag = 'scoped mem for output reshape']
    %s2 = smov 3
    %v3 = vld [vmem:[%s0] ss:$16 sm:%s2]
    %s4 = smov 12
    %v5 = vld [vmem:[%s0] ss:$16 sm:%s4]
    %vm6 = vcmask 1043458
    %v7 = vsel %vm6, %v5, %v3
    %vm8 = vcmask 113664
    %9 = vst.msk [vmem:[#allocation0] sm:$0xf] %vm8, %v7
    %s10 = scalar_lea.vmem %s0, 9
    %s11 = smov 3
    %v12 = vld [vmem:[%s10] ss:$16 sm:%s11]
    %s13 = scalar_lea.vmem %s0, 9
    %s14 = smov 12
    %v15 = vld [vmem:[%s13] ss:$16 sm:%s14]
    %vm16 = vcmask 1043458
    %v17 = vsel %vm16, %v15, %v12
    %s18 = scalar_lea.vmem %s0, 9
    %s19 = smov 3
    %v20 = vld [vmem:[%s18] ss:$16 sm:%s19]
    %s21 = scalar_lea.vmem %s0, 9
    %s22 = smov 12
    %v23 = vld [vmem:[%s21] ss:$16 sm:%s22]
    %vm24 = vcmask 1043458
    %v25 = vsel %vm24, %v23, %v20
    %vm26 = vcmask 15360
    %v27 = vsel %vm26, %v25, %v17
    %28 = vrot.lane.b32.xlu0 %v27, 126
    %v29 = vpop.permute.xlu0 %28
    %vm30 = vcmask 97280
    %s31 = scalar_lea.vmem [#allocation0], 8
    %32 = vst.msk [vmem:[%s31] sm:$0xf] %vm30, %v29
    %vm33 = vcmask 1048560
    %34 = vst.msk [vmem:[#allocation0] sm:$0xf] %vm33, %v29
    %s35 = scalar_lea.vmem %s0, 8
    %s36 = smov 3
    %v37 = vld [vmem:[%s35] ss:$16 sm:%s36]
    %s38 = scalar_lea.vmem %s0, 8
    %s39 = smov 12
    %v40 = vld [vmem:[%s38] ss:$16 sm:%s39]
    %vm41 = vcmask 1043458
    %v42 = vsel %vm41, %v40, %v37
    %43 = vrot.lane.b32.xlu0 %v42, 112
    %v44 = vpop.permute.xlu0 %43
    %vm45 = vcmask 1032064
    %46 = vst.msk [vmem:[#allocation0] sm:$0xf] %vm45, %v44
    %s47 = scalar_lea.vmem %s0, 7
    %s48 = smov 3
    %v49 = vld [vmem:[%s47] ss:$16 sm:%s48]
    %s50 = scalar_lea.vmem %s0, 7
    %s51 = smov 12
    %v52 = vld [vmem:[%s50] ss:$16 sm:%s51]
    %vm53 = vcmask 1043458
    %v54 = vsel %vm53, %v52, %v49
    %55 = vrot.lane.b32.xlu0 %v54, 98
    %v56 = vpop.permute.xlu0 %55
    %vm57 = vcmask 917264
    %58 = vst.msk [vmem:[#allocation0] sm:$0xf] %vm57, %v56
    %s59 = scalar_lea.vmem %s0, 6
    %s60 = smov 3
    %v61 = vld [vmem:[%s59] ss:$16 sm:%s60]
    %s62 = scalar_lea.vmem %s0, 6
    %s63 = smov 12
    %v64 = vld [vmem:[%s62] ss:$16 sm:%s63]
    %vm65 = vcmask 1043458
    %v66 = vsel %vm65, %v64, %v61
    %67 = vrot.lane.b32.xlu0 %v66, 84
    %v68 = vpop.permute.xlu0 %67
    %vm69 = vcmask 802464
    %70 = vst.msk [vmem:[#allocation0] sm:$0xf] %vm69, %v68
    %s71 = scalar_lea.vmem %s0, 5
    %s72 = smov 3
    %v73 = vld [vmem:[%s71] ss:$16 sm:%s72]
    %s74 = scalar_lea.vmem %s0, 5
    %s75 = smov 12
    %v76 = vld [vmem:[%s74] ss:$16 sm:%s75]
    %vm77 = vcmask 1043458
    %v78 = vsel %vm77, %v76, %v73
    %79 = vrot.lane.b32.xlu0 %v78, 70
    %v80 = vpop.permute.xlu0 %79
    %vm81 = vcmask 687664
    %82 = vst.msk [vmem:[#allocation0] sm:$0xf] %vm81, %v80
    %s83 = scalar_lea.vmem %s0, 4
    %s84 = smov 3
    %v85 = vld [vmem:[%s83] ss:$16 sm:%s84]
    %s86 = scalar_lea.vmem %s0, 4
    %s87 = smov 12
    %v88 = vld [vmem:[%s86] ss:$16 sm:%s87]
    %vm89 = vcmask 1043458
    %v90 = vsel %vm89, %v88, %v85
    %91 = vrot.lane.b32.xlu0 %v90, 56
    %v92 = vpop.permute.xlu0 %91
    %vm93 = vcmask 572864
    %94 = vst.msk [vmem:[#allocation0] sm:$0xf] %vm93, %v92
    %s95 = scalar_lea.vmem %s0, 13
    %s96 = smov 3
    %v97 = vld [vmem:[%s95] ss:$16 sm:%s96]
    %s98 = scalar_lea.vmem %s0, 13
    %s99 = smov 12
    %v100 = vld [vmem:[%s98] ss:$16 sm:%s99]
    %vm101 = vcmask 1043458
    %v102 = vsel %vm101, %v100, %v97
    %103 = vrot.lane.b32.xlu0 %v102, 54
    %v104 = vpop.permute.xlu0 %103
    %vm105 = vcmask 556464
    %s106 = scalar_lea.vmem [#allocation0], 8
    %107 = vst.msk [vmem:[%s106] sm:$0xf] %vm105, %v104
    %s108 = scalar_lea.vmem %s0, 3
    %s109 = smov 3
    %v110 = vld [vmem:[%s108] ss:$16 sm:%s109]
    %s111 = scalar_lea.vmem %s0, 3
    %s112 = smov 12
    %v113 = vld [vmem:[%s111] ss:$16 sm:%s112]
    %vm114 = vcmask 1043458
    %v115 = vsel %vm114, %v113, %v110
    %116 = vrot.lane.b32.xlu0 %v115, 42
    %v117 = vpop.permute.xlu0 %116
    %vm118 = vcmask 458064
    %119 = vst.msk [vmem:[#allocation0] sm:$0xf] %vm118, %v117
    %s120 = scalar_lea.vmem %s0, 12
    %s121 = smov 3
    %v122 = vld [vmem:[%s120] ss:$16 sm:%s121]
    %s123 = scalar_lea.vmem %s0, 12
    %s124 = smov 12
    %v125 = vld [vmem:[%s123] ss:$16 sm:%s124]
    %vm126 = vcmask 1043458
    %v127 = vsel %vm126, %v125, %v122
    %128 = vrot.lane.b32.xlu0 %v127, 40
    %v129 = vpop.permute.xlu0 %128
    %vm130 = vcmask 441664
    %s131 = scalar_lea.vmem [#allocation0], 8
    %132 = vst.msk [vmem:[%s131] sm:$0xf] %vm130, %v129
    %s133 = scalar_lea.vmem %s0, 2
    %s134 = smov 3
    %v135 = vld [vmem:[%s133] ss:$16 sm:%s134]
    %s136 = scalar_lea.vmem %s0, 2
    %s137 = smov 12
    %v138 = vld [vmem:[%s136] ss:$16 sm:%s137]
    %vm139 = vcmask 1043458
    %v140 = vsel %vm139, %v138, %v135
    %141 = vrot.lane.b32.xlu0 %v140, 28
    %v142 = vpop.permute.xlu0 %141
    %vm143 = vcmask 343264
    %144 = vst.msk [vmem:[#allocation0] sm:$0xf] %vm143, %v142
    %s145 = scalar_lea.vmem %s0, 11
    %s146 = smov 3
    %v147 = vld [vmem:[%s145] ss:$16 sm:%s146]
    %s148 = scalar_lea.vmem %s0, 11
    %s149 = smov 12
    %v150 = vld [vmem:[%s148] ss:$16 sm:%s149]
    %vm151 = vcmask 1043458
    %v152 = vsel %vm151, %v150, %v147
    %153 = vrot.lane.b32.xlu0 %v152, 26
    %v154 = vpop.permute.xlu0 %153
    %vm155 = vcmask 326864
    %s156 = scalar_lea.vmem [#allocation0], 8
    %157 = vst.msk [vmem:[%s156] sm:$0xf] %vm155, %v154
    %s158 = scalar_lea.vmem %s0, 1
    %s159 = smov 3
    %v160 = vld [vmem:[%s158] ss:$16 sm:%s159]
    %s161 = scalar_lea.vmem %s0, 1
    %s162 = smov 12
    %v163 = vld [vmem:[%s161] ss:$16 sm:%s162]
    %vm164 = vcmask 1043458
    %v165 = vsel %vm164, %v163, %v160
    %166 = vrot.lane.b32.xlu0 %v165, 14
    %v167 = vpop.permute.xlu0 %166
    %vm168 = vcmask 228464
    %169 = vst.msk [vmem:[#allocation0] sm:$0xf] %vm168, %v167
    %s170 = scalar_lea.vmem %s0, 10
    %s171 = smov 3
    %v172 = vld [vmem:[%s170] ss:$16 sm:%s171]
    %s173 = scalar_lea.vmem %s0, 10
    %s174 = smov 12
    %v175 = vld [vmem:[%s173] ss:$16 sm:%s174]
    %vm176 = vcmask 1043458
    %v177 = vsel %vm176, %v175, %v172
    %178 = vrot.lane.b32.xlu0 %v177, 12
    %v179 = vpop.permute.xlu0 %178
    %vm180 = vcmask 212064
    %s181 = scalar_lea.vmem [#allocation0], 8
    %182 = vst.msk [vmem:[%s181] sm:$0xf] %vm180, %v179
    %s184 = sshllo.u32 0, 4
    %v186 = vld [vmem:[#allocation0] sm:%s184]
    %s187 = sshllo.u32 0, 4
    %188 = vst [vmem:[%s1] sm:%s187] %v186
    %s189 = scalar_lea.vmem [#allocation0], 8
    %v190 = vld [vmem:[%s189] sm:%s184]
    %s191 = sshllo.u32 0, 4
    %s192 = scalar_lea.vmem %s1, 4
    %193 = vst [vmem:[%s192] sm:%s191] %v190

// kernel: forward.1
$region0: #{forward.1}
  #allocation0 [shape = 'u32[]', space=smem, size = 0x4, offset = 0x4, fixed_abs, tag = 'smem constant byte address 0x4 - core index']
  #allocation1 [shape = 'u32[144,128]{1,0:T(1,128)}', space=vmem, size = 0x12000, scoped, tag = 'internal scratch']
  #allocation2 [shape = 'f32[1]{0:T(128)S(6)}', space=smem, size = 0x200, scoped, tag = 'scoped memory for forward.1']
  %s0 = inlined_call_operand.vmem [shape: f32[9,8,256], index: 0, kind: input, shape index: {}]
  %s1 = inlined_call_operand.vmem [shape: f32[10], index: 1, kind: input, shape index: {}]
  %s2 = inlined_call_operand.<no memory space> [shape: f32[1], index: 2, kind: input, shape index: {}]
  %s3 = inlined_call_operand.vmem [shape: bf16[1,256,32], index: 3, kind: input, shape index: {}]
  %s4 = inlined_call_operand.vmem [shape: bf16[32,512], index: 4, kind: input, shape index: {}]
  %s5 = inlined_call_operand.vmem [shape: bf16[32,128], index: 5, kind: input, shape index: {}]
  %s6 = inlined_call_operand.vmem [shape: f32[1,512], index: 6, kind: input, shape index: {}]
  %s7 = inlined_call_operand.vmem [shape: f32[2,384], index: 7, kind: output, shape index: {0}]
  %s8 = inlined_call_operand.vmem [shape: f32[8,256], index: 8, kind: output, shape index: {1}]
  %9 = xla_tuple %s7, %s8
  %s10 = sld [smem:[#allocation0]]
  $region50: #{forward.1} parent=0
    _
  %s12 = ssub.s32 1, %s10
  %s13 = scalar_select 0, %s12, %s10
  %14 = sst [smem:[#allocation2]] %s2
  $region1: #{forward.1} parent=0
    #allocation3 [shape = 'u8[512]{0}', space=smem, size = 0x200, scoped, tag = 'input window, operand 1, single buffered']
    #allocation4 [shape = 's32[1]{0}', space=sflag, size = 0x4, scoped, tag = 'scoped memory for forward.1']
    %15 = vsyncpa [#allocation4], 0
    // Predicated region
    $region2: #{forward.1} parent=1 // pred_check
      _
    $region3: #{forward.1} parent=1 // pred_check_branch
      %17 = sbr.rel (0) target = $region5
    $region4: #{forward.1} parent=1 // pred_region
      _
    $region5: #{forward.1} parent=1 // pred_fallthru
      _
    // Predicated region
    $region6: #{forward.1} parent=1 // pred_check
      _
    $region7: #{forward.1} parent=1 // pred_check_branch
      %19 = sbr.rel (0) target = $region9
    $region8: #{forward.1} parent=1 // pred_region
      %s21 = ssub.s32 16, 16
      %22 = vsyncadd [#allocation4], %s21
      %s24 = sshll.u32 %s1, 4
      %s25 = int_to_ptr.vmem [resolvable:$true] %s24
      %27 = dma.vmem_to_smem %s25, 16, [#allocation3], [#allocation4]
    $region9: #{forward.1} parent=1 // pred_fallthru
      _
    // Predicated region
    $region10: #{forward.1} parent=1 // pred_check
      _
    $region11: #{forward.1} parent=1 // pred_check_branch
      %29 = sbr.rel (0) target = $region13
    $region12: #{forward.1} parent=1 // pred_region
      _
    $region13: #{forward.1} parent=1 // pred_fallthru
      _
    // Predicated region
    $region14: #{forward.1} parent=1 // pred_check
      _
    $region15: #{forward.1} parent=1 // pred_check_branch
      %31 = sbr.rel (0) target = $region17
    $region16: #{forward.1} parent=1 // pred_region
      _
    $region17: #{forward.1} parent=1 // pred_fallthru
      _
    // Predicated region
    $region18: #{forward.1} parent=1 // pred_check
      _
    $region19: #{forward.1} parent=1 // pred_check_branch
      %33 = sbr.rel (0) target = $region21
    $region20: #{forward.1} parent=1 // pred_region
      _
    $region21: #{forward.1} parent=1 // pred_fallthru
      _
    // Predicated region
    $region22: #{forward.1} parent=1 // pred_check
      _
    $region23: #{forward.1} parent=1 // pred_check_branch
      %35 = sbr.rel (0) target = $region25
    $region24: #{forward.1} parent=1 // pred_region
      _
    $region25: #{forward.1} parent=1 // pred_fallthru
      _
    // Predicated region
    $region26: #{forward.1} parent=1 // pred_check
      _
    $region27: #{forward.1} parent=1 // pred_check_branch
      %37 = sbr.rel (0) target = $region29
    $region28: #{forward.1} parent=1 // pred_region
      _
    $region29: #{forward.1} parent=1 // pred_fallthru
      _
    // Predicated region
    $region30: #{forward.1} parent=1 // pred_check
      _
    $region31: #{forward.1} parent=1 // pred_check_branch
      %39 = sbr.rel (0) target = $region33
    $region32: #{forward.1} parent=1 // pred_region
      %40 = dma.done [#allocation4], 16
    $region33: #{forward.1} parent=1 // pred_fallthru
      _
    %41 = sfence
    %s43 = sld [smem:[#allocation2]]
    %v44 = vld [vmem:[%s6 + $0x2] sm:$0x1]
    %v46 = vlaneseq
    %v47 = vshrl.u32 %v46, 7
    %v48 = vsub.s32 0, %v47
    %v49 = vrot.slane %v44, %v48
    %v51 = vadd.f32 %v49, 0.0
    %v52 = vld [vmem:[%s0] sm:$0xff]
    %v53 = vld [vmem:[%s0 + $0x8] sm:$0xff]
    %s54 = sld [smem:[#allocation3]]
    %v55 = vstv %s54
    %v56 = vmul.f32 %v52, %v55
    %v57 = vmul.f32 %v53, %v55
    %v58 = vadd.f32 %v56, 0.0
    %v59 = vadd.f32 %v57, 0.0
    %s60 = scalar_lea.vmem %s0, 16
    %v61 = vld [vmem:[%s60] sm:$0xff]
    %v62 = vld [vmem:[%s60 + $0x8] sm:$0xff]
    %s63 = sld [smem:[#allocation3 + $0x1]]
    %v64 = vstv %s63
    %v65 = vmul.f32 %v61, %v64
    %v66 = vmul.f32 %v62, %v64
    %v67 = vadd.f32 %v58, %v65
    %v68 = vadd.f32 %v59, %v66
    %s69 = scalar_lea.vmem %s0, 32
    %v70 = vld [vmem:[%s69] sm:$0xff]
    %v71 = vld [vmem:[%s69 + $0x8] sm:$0xff]
    %s72 = sld [smem:[#allocation3 + $0x2]]
    %v73 = vstv %s72
    %v74 = vmul.f32 %v70, %v73
    %v75 = vmul.f32 %v71, %v73
    %v76 = vadd.f32 %v67, %v74
    %v77 = vadd.f32 %v68, %v75
    %s78 = scalar_lea.vmem %s0, 48
    %v79 = vld [vmem:[%s78] sm:$0xff]
    %v80 = vld [vmem:[%s78 + $0x8] sm:$0xff]
    %s81 = sld [smem:[#allocation3 + $0x3]]
    %v82 = vstv %s81
    %v83 = vmul.f32 %v79, %v82
    %v84 = vmul.f32 %v80, %v82
    %v85 = vadd.f32 %v76, %v83
    %v86 = vadd.f32 %v77, %v84
    %s87 = scalar_lea.vmem %s0, 64
    %v88 = vld [vmem:[%s87] sm:$0xff]
    %v89 = vld [vmem:[%s87 + $0x8] sm:$0xff]
    %s90 = sld [smem:[#allocation3 + $0x4]]
    %v91 = vstv %s90
    %v92 = vmul.f32 %v88, %v91
    %v93 = vmul.f32 %v89, %v91
    %v94 = vadd.f32 %v85, %v92
    %v95 = vadd.f32 %v86, %v93
    %s96 = scalar_lea.vmem %s0, 80
    %v97 = vld [vmem:[%s96] sm:$0xff]
    %v98 = vld [vmem:[%s96 + $0x8] sm:$0xff]
    %s99 = sld [smem:[#allocation3 + $0x5]]
    %v100 = vstv %s99
    %v101 = vmul.f32 %v97, %v100
    %v102 = vmul.f32 %v98, %v100
    %v103 = vadd.f32 %v94, %v101
    %v104 = vadd.f32 %v95, %v102
    %s105 = scalar_lea.vmem %s0, 96
    %v106 = vld [vmem:[%s105] sm:$0xff]
    %v107 = vld [vmem:[%s105 + $0x8] sm:$0xff]
    %s108 = sld [smem:[#allocation3 + $0x6]]
    %v109 = vstv %s108
    %v110 = vmul.f32 %v106, %v109
    %v111 = vmul.f32 %v107, %v109
    %v112 = vadd.f32 %v103, %v110
    %v113 = vadd.f32 %v104, %v111
    %s114 = scalar_lea.vmem %s0, 112
    %v115 = vld [vmem:[%s114] sm:$0xff]
    %v116 = vld [vmem:[%s114 + $0x8] sm:$0xff]
    %s117 = sld [smem:[#allocation3 + $0x7]]
    %v118 = vstv %s117
    %v119 = vmul.f32 %v115, %v118
    %v120 = vmul.f32 %v116, %v118
    %v121 = vadd.f32 %v112, %v119
    %v122 = vadd.f32 %v113, %v120
    %s123 = scalar_lea.vmem %s0, 128
    %v124 = vld [vmem:[%s123] sm:$0xff]
    %v125 = vld [vmem:[%s123 + $0x8] sm:$0xff]
    %s126 = sld [smem:[#allocation3 + $0x8]]
    %v127 = vstv %s126
    %v128 = vmul.f32 %v124, %v127
    %v129 = vmul.f32 %v125, %v127
    %v130 = vadd.f32 %v121, %v128
    %v131 = vadd.f32 %v122, %v129
    %s132 = sld [smem:[#allocation3 + $0x9]]
    %v133 = vstv %s132
    %v134 = vadd.f32 %v130, %v133
    %v135 = vadd.f32 %v131, %v133
    %v136 = vmax.f32 %v134, 0.0
    %v137 = vmax.f32 %v135, 0.0
    %v138 = vpack.c.bf16 %v136, %v136
    %v139 = vpack.c.bf16 %v137, %v137
    %v140 = vld [vmem:[%s3] sm:$0xf]
    %v141 = vld [vmem:[%s3 + $0x4] sm:$0xf]
    %v142 = vld [vmem:[%s3 + $0x8] sm:$0xf]
    %v143 = vld [vmem:[%s3 + $0xc] sm:$0xf]
    %v144 = vld [vmem:[%s3 + $0x10] sm:$0xf]
    %v145 = vld [vmem:[%s3 + $0x14] sm:$0xf]
    %v146 = vld [vmem:[%s3 + $0x18] sm:$0xf]
    %v147 = vld [vmem:[%s3 + $0x1c] sm:$0xf]
    %v148 = vld [vmem:[%s3 + $0x20] sm:$0xf]
    %v149 = vld [vmem:[%s3 + $0x24] sm:$0xf]
    %v150 = vld [vmem:[%s3 + $0x28] sm:$0xf]
    %v151 = vld [vmem:[%s3 + $0x2c] sm:$0xf]
    %v152 = vld [vmem:[%s3 + $0x30] sm:$0xf]
    %v153 = vld [vmem:[%s3 + $0x34] sm:$0xf]
    %v154 = vld [vmem:[%s3 + $0x38] sm:$0xf]
    %v155 = vld [vmem:[%s3 + $0x3c] sm:$0xf]
    %v156 = vld [vmem:[%s3 + $0x40] sm:$0xf]
    %v157 = vld [vmem:[%s3 + $0x44] sm:$0xf]
    %v158 = vld [vmem:[%s3 + $0x48] sm:$0xf]
    %v159 = vld [vmem:[%s3 + $0x4c] sm:$0xf]
    %v160 = vld [vmem:[%s3 + $0x50] sm:$0xf]
    %v161 = vld [vmem:[%s3 + $0x54] sm:$0xf]
    %v162 = vld [vmem:[%s3 + $0x58] sm:$0xf]
    %v163 = vld [vmem:[%s3 + $0x5c] sm:$0xf]
    %v164 = vld [vmem:[%s3 + $0x60] sm:$0xf]
    %v165 = vld [vmem:[%s3 + $0x64] sm:$0xf]
    %v166 = vld [vmem:[%s3 + $0x68] sm:$0xf]
    %v167 = vld [vmem:[%s3 + $0x6c] sm:$0xf]
    %v168 = vld [vmem:[%s3 + $0x70] sm:$0xf]
    %v169 = vld [vmem:[%s3 + $0x74] sm:$0xf]
    %v170 = vld [vmem:[%s3 + $0x78] sm:$0xf]
    %v171 = vld [vmem:[%s3 + $0x7c] sm:$0xf]
    %v204 = vunpack.c.l.b16 %v140
    %v205 = vunpack.c.l.b16 %v141
    %v206 = vunpack.c.l.b16 %v142
    %v207 = vunpack.c.l.b16 %v143
    %v208 = vunpack.c.l.b16 %v144
    %v209 = vunpack.c.l.b16 %v145
    %v210 = vunpack.c.l.b16 %v146
    %v211 = vunpack.c.l.b16 %v147
    %v212 = vunpack.c.l.b16 %v148
    %v213 = vunpack.c.l.b16 %v149
    %v214 = vunpack.c.l.b16 %v150
    %v215 = vunpack.c.l.b16 %v151
    %v216 = vunpack.c.l.b16 %v152
    %v217 = vunpack.c.l.b16 %v153
    %v218 = vunpack.c.l.b16 %v154
    %v219 = vunpack.c.l.b16 %v155
    %v220 = vunpack.c.l.b16 %v156
    %v221 = vunpack.c.l.b16 %v157
    %v222 = vunpack.c.l.b16 %v158
    %v223 = vunpack.c.l.b16 %v159
    %v224 = vunpack.c.l.b16 %v160
    %v225 = vunpack.c.l.b16 %v161
    %v226 = vunpack.c.l.b16 %v162
    %v227 = vunpack.c.l.b16 %v163
    %v228 = vunpack.c.l.b16 %v164
    %v229 = vunpack.c.l.b16 %v165
    %v230 = vunpack.c.l.b16 %v166
    %v231 = vunpack.c.l.b16 %v167
    %v232 = vunpack.c.l.b16 %v168
    %v233 = vunpack.c.l.b16 %v169
    %v234 = vunpack.c.l.b16 %v170
    %v235 = vunpack.c.l.b16 %v171
    %v236 = vpack.c.b16 %v205, %v204
    %v237 = vpack.c.b16 %v207, %v206
    %v238 = vpack.c.b16 %v209, %v208
    %v239 = vpack.c.b16 %v211, %v210
    %v240 = vpack.c.b16 %v213, %v212
    %v241 = vpack.c.b16 %v215, %v214
    %v242 = vpack.c.b16 %v217, %v216
    %v243 = vpack.c.b16 %v219, %v218
    %v244 = vpack.c.b16 %v221, %v220
    %v245 = vpack.c.b16 %v223, %v222
    %v246 = vpack.c.b16 %v225, %v224
    %v247 = vpack.c.b16 %v227, %v226
    %v248 = vpack.c.b16 %v229, %v228
    %v249 = vpack.c.b16 %v231, %v230
    %v250 = vpack.c.b16 %v233, %v232
    %v251 = vpack.c.b16 %v235, %v234
    %268 = vmatprep.subr.bf16.mxu0 0
    %269 = vmatpush1.bf16.msra.mxu0 %v236
    %270 = vmatprep.subr.bf16.mxu0 0
    %271 = vmatpush1.bf16.msra.mxu0 %v237
    %272 = vmatprep.subr.bf16.mxu0 0
    %273 = vmatpush1.bf16.msra.mxu0 %v238
    %274 = vmatprep.subr.bf16.mxu0 0
    %275 = vmatpush1.bf16.msra.mxu0 %v239
    %276 = vmatprep.subr.bf16.mxu0 0
    %277 = vmatpush1.bf16.msra.mxu0 %v240
    %278 = vmatprep.subr.bf16.mxu0 0
    %279 = vmatpush1.bf16.msra.mxu0 %v241
    %280 = vmatprep.subr.bf16.mxu0 0
    %281 = vmatpush1.bf16.msra.mxu0 %v242
    %282 = vmatprep.subr.bf16.mxu0 0
    %283 = vmatpush1.bf16.msra.mxu0 %v243
    %284 = vmatprep.subr.bf16.mxu0 0
    %285 = vmatpush1.bf16.msra.mxu0 %v244
    %286 = vmatprep.subr.bf16.mxu0 0
    %287 = vmatpush1.bf16.msra.mxu0 %v245
    %288 = vmatprep.subr.bf16.mxu0 0
    %289 = vmatpush1.bf16.msra.mxu0 %v246
    %290 = vmatprep.subr.bf16.mxu0 0
    %291 = vmatpush1.bf16.msra.mxu0 %v247
    %292 = vmatprep.subr.bf16.mxu0 0
    %293 = vmatpush1.bf16.msra.mxu0 %v248
    %294 = vmatprep.subr.bf16.mxu0 0
    %295 = vmatpush1.bf16.msra.mxu0 %v249
    %296 = vmatprep.subr.bf16.mxu0 0
    %297 = vmatpush1.bf16.msra.mxu0 %v250
    %298 = vmatprep.subr.bf16.mxu0 0
    %299 = vmatpush1.bf16.msra.mxu0 %v251
    %300 = vmatprep.mubr.bf16.mxu0 %v139
    %301 = vmatmul.mubr.bf16.gmra.mrb[0].mxu0 %v138
    %v302 = vpop.f32.mrb[0].mxu0
    %v303 = vadd.f32 0.0, %v302
    %v304 = vpop.f32.mrb[0].mxu0
    %v305 = vpop.f32.mrb[0].mxu0
    %v306 = vpop.f32.mrb[0].mxu0
    %307 = vdwg.mxu0
    %v308 = vadd.f32 %v51, %v303
    %v309 = vstv %s43
    %v310 = vmul.f32 %v308, %v309
    %v311 = vxor.u32 %v310, 2147483648
    %v312 = vmul.f32 %v311, 1.442695
    %v313 = vpow.pop %v312
    %v314 = vadd.f32 %v313, 1.0
    %v315 = vrcp.pop %v314
    %v316 = vmul.f32 1.0, %v315
    %v317 = vld [vmem:[%s4 + $0x8] sm:$0xf]
    %v318 = vld [vmem:[%s4 + $0x18] sm:$0xf]
    %v319 = vld [vmem:[%s4 + $0x28] sm:$0xf]
    %v320 = vld [vmem:[%s4 + $0x38] sm:$0xf]
    %v321 = vpack.c.bf16 %v308, %v308
    %v323 = vrot.slane %v321, 1
    %v328 = vunpack.c.l.b16 %v317
    %v329 = vunpack.c.l.b16 %v318
    %v330 = vunpack.c.l.b16 %v319
    %v331 = vunpack.c.l.b16 %v320
    %v332 = vpack.c.b16 %v329, %v328
    %v333 = vpack.c.b16 %v331, %v330
    %334 = vrot.lane.b32.xlu0 %v332, 96
    %v335 = vpop.permute.xlu0 %334
    %336 = vrot.lane.b32.xlu0 %v333, 96
    %v337 = vpop.permute.xlu0 %336
    %vm340 = vcmask 261120
    %v342 = vsel %vm340, %v323, 0
    %344 = vmatprep.subr.bf16.mxu0 0
    %345 = vmatpush1.bf16.msra.mxu0 %v335
    %346 = vmatprep.subr.bf16.mxu0 0
    %347 = vmatpush1.bf16.msra.mxu0 %v337
    %348 = vmatprep.subr.bf16.mxu0 0
    %349 = vmatpush1.bf16.msra.mxu0 0
    %350 = vmatprep.subr.bf16.mxu0 0
    %351 = vmatpush1.bf16.msra.mxu0 0
    %352 = vmatprep.subr.bf16.mxu0 0
    %353 = vmatpush1.bf16.msra.mxu0 0
    %354 = vmatprep.subr.bf16.mxu0 0
    %355 = vmatpush1.bf16.msra.mxu0 0
    %356 = vmatprep.subr.bf16.mxu0 0
    %357 = vmatpush1.bf16.msra.mxu0 0
    %358 = vmatprep.subr.bf16.mxu0 0
    %359 = vmatpush1.bf16.msra.mxu0 0
    %360 = vmatprep.subr.bf16.mxu0 0
    %361 = vmatpush1.bf16.msra.mxu0 0
    %362 = vmatprep.subr.bf16.mxu0 0
    %363 = vmatpush1.bf16.msra.mxu0 0
    %364 = vmatprep.subr.bf16.mxu0 0
    %365 = vmatpush1.bf16.msra.mxu0 0
    %366 = vmatprep.subr.bf16.mxu0 0
    %367 = vmatpush1.bf16.msra.mxu0 0
    %368 = vmatprep.subr.bf16.mxu0 0
    %369 = vmatpush1.bf16.msra.mxu0 0
    %370 = vmatprep.subr.bf16.mxu0 0
    %371 = vmatpush1.bf16.msra.mxu0 0
    %372 = vmatprep.subr.bf16.mxu0 0
    %373 = vmatpush1.bf16.msra.mxu0 0
    %374 = vmatprep.subr.bf16.mxu0 0
    %375 = vmatpush1.bf16.msra.mxu0 0
    %376 = vmatprep.mubr.bf16.mxu0 0
    %377 = vmatmul.mubr.bf16.gmra.mrb[0].mxu0 %v342
    %v378 = vpop.f32.mrb[0].mxu0
    %v379 = vadd.f32 0.0, %v378
    %v380 = vpop.f32.mrb[0].mxu0
    %v381 = vpop.f32.mrb[0].mxu0
    %v382 = vpop.f32.mrb[0].mxu0
    %383 = vdwg.mxu0
    %v387 = vsel %vm340, %v321, 0
    %389 = vmatprep.subr.bf16.mxu0 0
    %390 = vmatpush1.bf16.msra.mxu0 %v332
    %391 = vmatprep.subr.bf16.mxu0 0
    %392 = vmatpush1.bf16.msra.mxu0 %v333
    %393 = vmatprep.subr.bf16.mxu0 0
    %394 = vmatpush1.bf16.msra.mxu0 0
    %395 = vmatprep.subr.bf16.mxu0 0
    %396 = vmatpush1.bf16.msra.mxu0 0
    %397 = vmatprep.subr.bf16.mxu0 0
    %398 = vmatpush1.bf16.msra.mxu0 0
    %399 = vmatprep.subr.bf16.mxu0 0
    %400 = vmatpush1.bf16.msra.mxu0 0
    %401 = vmatprep.subr.bf16.mxu0 0
    %402 = vmatpush1.bf16.msra.mxu0 0
    %403 = vmatprep.subr.bf16.mxu0 0
    %404 = vmatpush1.bf16.msra.mxu0 0
    %405 = vmatprep.subr.bf16.mxu0 0
    %406 = vmatpush1.bf16.msra.mxu0 0
    %407 = vmatprep.subr.bf16.mxu0 0
    %408 = vmatpush1.bf16.msra.mxu0 0
    %409 = vmatprep.subr.bf16.mxu0 0
    %410 = vmatpush1.bf16.msra.mxu0 0
    %411 = vmatprep.subr.bf16.mxu0 0
    %412 = vmatpush1.bf16.msra.mxu0 0
    %413 = vmatprep.subr.bf16.mxu0 0
    %414 = vmatpush1.bf16.msra.mxu0 0
    %415 = vmatprep.subr.bf16.mxu0 0
    %416 = vmatpush1.bf16.msra.mxu0 0
    %417 = vmatprep.subr.bf16.mxu0 0
    %418 = vmatpush1.bf16.msra.mxu0 0
    %419 = vmatprep.subr.bf16.mxu0 0
    %420 = vmatpush1.bf16.msra.mxu0 0
    %421 = vmatprep.mubr.bf16.mxu0 0
    %422 = vmatmul.mubr.bf16.gmra.mrb[0].mxu0 %v387
    %v423 = vpop.f32.mrb[0].mxu0
    %v424 = vadd.f32 %v379, %v423
    %v425 = vpop.f32.mrb[0].mxu0
    %v426 = vpop.f32.mrb[0].mxu0
    %v427 = vpop.f32.mrb[0].mxu0
    %428 = vdwg.mxu0
    %429 = vrot.lane.b32.xlu0 %v49, 96
    %v430 = vpop.permute.xlu0 %429
    %v432 = vadd.f32 %v424, %v430
    %v433 = vmax.f32 %v432, 0.0
    %v434 = vld [vmem:[%s5] sm:$0xf]
    %v435 = vld [vmem:[%s5 + $0x4] sm:$0xf]
    %v436 = vld [vmem:[%s5 + $0x8] sm:$0xf]
    %v437 = vld [vmem:[%s5 + $0xc] sm:$0xf]
    %v438 = vpack.c.bf16 %v433, %v433
    %v443 = vunpack.c.l.b16 %v434
    %v444 = vunpack.c.l.b16 %v435
    %v445 = vunpack.c.l.b16 %v436
    %v446 = vunpack.c.l.b16 %v437
    %v447 = vpack.c.b16 %v444, %v443
    %v448 = vpack.c.b16 %v446, %v445
    %451 = vrot.lane.b32.xlu0 %v49, 64
    %v452 = vpop.permute.xlu0 %451
    %v455 = vsel %vm340, %v438, 0
    %457 = vmatprep.subr.bf16.mxu0 0
    %458 = vmatpush1.bf16.msra.mxu0 %v447
    %459 = vmatprep.subr.bf16.mxu0 0
    %460 = vmatpush1.bf16.msra.mxu0 %v448
    %461 = vmatprep.subr.bf16.mxu0 0
    %462 = vmatpush1.bf16.msra.mxu0 0
    %463 = vmatprep.subr.bf16.mxu0 0
    %464 = vmatpush1.bf16.msra.mxu0 0
    %465 = vmatprep.subr.bf16.mxu0 0
    %466 = vmatpush1.bf16.msra.mxu0 0
    %467 = vmatprep.subr.bf16.mxu0 0
    %468 = vmatpush1.bf16.msra.mxu0 0
    %469 = vmatprep.subr.bf16.mxu0 0
    %470 = vmatpush1.bf16.msra.mxu0 0
    %471 = vmatprep.subr.bf16.mxu0 0
    %472 = vmatpush1.bf16.msra.mxu0 0
    %473 = vmatprep.subr.bf16.mxu0 0
    %474 = vmatpush1.bf16.msra.mxu0 0
    %475 = vmatprep.subr.bf16.mxu0 0
    %476 = vmatpush1.bf16.msra.mxu0 0
    %477 = vmatprep.subr.bf16.mxu0 0
    %478 = vmatpush1.bf16.msra.mxu0 0
    %479 = vmatprep.subr.bf16.mxu0 0
    %480 = vmatpush1.bf16.msra.mxu0 0
    %481 = vmatprep.subr.bf16.mxu0 0
    %482 = vmatpush1.bf16.msra.mxu0 0
    %483 = vmatprep.subr.bf16.mxu0 0
    %484 = vmatpush1.bf16.msra.mxu0 0
    %485 = vmatprep.subr.bf16.mxu0 0
    %486 = vmatpush1.bf16.msra.mxu0 0
    %487 = vmatprep.subr.bf16.mxu0 0
    %488 = vmatpush1.bf16.msra.mxu0 0
    %489 = vmatprep.mubr.bf16.mxu0 0
    %490 = vmatmul.mubr.bf16.gmra.mrb[0].mxu0 %v455
    %v491 = vpop.f32.mrb[0].mxu0
    %v492 = vadd.f32 %v452, %v491
    %v493 = vpop.f32.mrb[0].mxu0
    %v494 = vpop.f32.mrb[0].mxu0
    %v495 = vpop.f32.mrb[0].mxu0
    %496 = vdwg.mxu0
    %v497 = vmul.f32 %v492, %v309
    %vm498 = vcmask 123904
    %v499 = vsel %vm498, %v497, -inf
    %500 = vmax.xlane.f32.xlu0 %v499
    %v501 = vpop.xlane.xlu0 %500
    %v502 = vsub.f32 %v497, %v501
    %v503 = vmul.f32 %v502, 1.442695
    %v504 = vpow.pop %v503
    %v505 = vsel %vm498, %v504, 0.0
    %506 = vadd.xlane.f32.xlu0 %v505
    %v507 = vpop.xlane.xlu0 %506
    %v508 = vrcp.pop %v507
    %v509 = vmul.f32 %v504, %v508
    %v510 = vld [vmem:[%s5] sm:$0xf]
    %v511 = vld [vmem:[%s5 + $0x4] sm:$0xf]
    %v512 = vld [vmem:[%s6 + $0x2] sm:$0x3]
    %v513 = vpack.c.bf16 %v509, %v509
    %v516 = vunpack.c.l.b16 %v510
    %v517 = vunpack.c.l.b16 %v511
    %v518 = vpack.c.b16 %v517, %v516
    %519 = vrot.lane.b32.xlu0 %v518, 112
    %v520 = vpop.permute.xlu0 %519
    %vm522 = vcmask 130048
    %v524 = vsel %vm522, %v513, 0
    %526 = vmatprep.subr.bf16.mxu0 0
    %527 = vmatpush1.bf16.msra.mxu0 %v520
    %528 = vmatprep.subr.bf16.mxu0 0
    %529 = vmatpush1.bf16.msra.mxu0 0
    %530 = vmatprep.subr.bf16.mxu0 0
    %531 = vmatpush1.bf16.msra.mxu0 0
    %532 = vmatprep.subr.bf16.mxu0 0
    %533 = vmatpush1.bf16.msra.mxu0 0
    %534 = vmatprep.subr.bf16.mxu0 0
    %535 = vmatpush1.bf16.msra.mxu0 0
    %536 = vmatprep.subr.bf16.mxu0 0
    %537 = vmatpush1.bf16.msra.mxu0 0
    %538 = vmatprep.subr.bf16.mxu0 0
    %539 = vmatpush1.bf16.msra.mxu0 0
    %540 = vmatprep.subr.bf16.mxu0 0
    %541 = vmatpush1.bf16.msra.mxu0 0
    %542 = vmatprep.subr.bf16.mxu0 0
    %543 = vmatpush1.bf16.msra.mxu0 0
    %544 = vmatprep.subr.bf16.mxu0 0
    %545 = vmatpush1.bf16.msra.mxu0 0
    %546 = vmatprep.subr.bf16.mxu0 0
    %547 = vmatpush1.bf16.msra.mxu0 0
    %548 = vmatprep.subr.bf16.mxu0 0
    %549 = vmatpush1.bf16.msra.mxu0 0
    %550 = vmatprep.subr.bf16.mxu0 0
    %551 = vmatpush1.bf16.msra.mxu0 0
    %552 = vmatprep.subr.bf16.mxu0 0
    %553 = vmatpush1.bf16.msra.mxu0 0
    %554 = vmatprep.subr.bf16.mxu0 0
    %555 = vmatpush1.bf16.msra.mxu0 0
    %556 = vmatprep.subr.bf16.mxu0 0
    %557 = vmatpush1.bf16.msra.mxu0 0
    %558 = vmatprep.mubr.bf16.mxu0 0
    %559 = vmatmul.mubr.bf16.gmra.mrb[0].mxu0 %v524
    %v560 = vpop.f32.mrb[0].mxu0
    %v561 = vadd.f32 0.0, %v560
    %v562 = vpop.f32.mrb[0].mxu0
    %v563 = vpop.f32.mrb[0].mxu0
    %v564 = vpop.f32.mrb[0].mxu0
    %565 = vdwg.mxu0
    %v566 = vpack.c.bf16 %v316, %v316
    %567 = vrot.lane.b32.xlu0 %v332, 64
    %v568 = vpop.permute.xlu0 %567
    %569 = vrot.lane.b32.xlu0 %v333, 64
    %v570 = vpop.permute.xlu0 %569
    %v574 = vsel %vm340, %v566, 0
    %576 = vmatprep.subr.bf16.mxu0 0
    %577 = vmatpush1.bf16.msra.mxu0 %v568
    %578 = vmatprep.subr.bf16.mxu0 0
    %579 = vmatpush1.bf16.msra.mxu0 %v570
    %580 = vmatprep.subr.bf16.mxu0 0
    %581 = vmatpush1.bf16.msra.mxu0 0
    %582 = vmatprep.subr.bf16.mxu0 0
    %583 = vmatpush1.bf16.msra.mxu0 0
    %584 = vmatprep.subr.bf16.mxu0 0
    %585 = vmatpush1.bf16.msra.mxu0 0
    %586 = vmatprep.subr.bf16.mxu0 0
    %587 = vmatpush1.bf16.msra.mxu0 0
    %588 = vmatprep.subr.bf16.mxu0 0
    %589 = vmatpush1.bf16.msra.mxu0 0
    %590 = vmatprep.subr.bf16.mxu0 0
    %591 = vmatpush1.bf16.msra.mxu0 0
    %592 = vmatprep.subr.bf16.mxu0 0
    %593 = vmatpush1.bf16.msra.mxu0 0
    %594 = vmatprep.subr.bf16.mxu0 0
    %595 = vmatpush1.bf16.msra.mxu0 0
    %596 = vmatprep.subr.bf16.mxu0 0
    %597 = vmatpush1.bf16.msra.mxu0 0
    %598 = vmatprep.subr.bf16.mxu0 0
    %599 = vmatpush1.bf16.msra.mxu0 0
    %600 = vmatprep.subr.bf16.mxu0 0
    %601 = vmatpush1.bf16.msra.mxu0 0
    %602 = vmatprep.subr.bf16.mxu0 0
    %603 = vmatpush1.bf16.msra.mxu0 0
    %604 = vmatprep.subr.bf16.mxu0 0
    %605 = vmatpush1.bf16.msra.mxu0 0
    %606 = vmatprep.subr.bf16.mxu0 0
    %607 = vmatpush1.bf16.msra.mxu0 0
    %608 = vmatprep.mubr.bf16.mxu0 0
    %609 = vmatmul.mubr.bf16.gmra.mrb[0].mxu0 %v574
    %v610 = vpop.f32.mrb[0].mxu0
    %v611 = vadd.f32 0.0, %v610
    %v612 = vpop.f32.mrb[0].mxu0
    %v613 = vpop.f32.mrb[0].mxu0
    %v614 = vpop.f32.mrb[0].mxu0
    %615 = vdwg.mxu0
    %v616 = vadd.f32 %v561, %v611
    %v618 = vlaneseq
    %v619 = vshrl.u32 %v618, 7
    %v620 = vsub.s32 0, %v619
    %v621 = vrot.slane %v512, %v620
    %622 = vrot.lane.b32.xlu0 %v621, 48
    %v623 = vpop.permute.xlu0 %622
    %v625 = vadd.f32 %v616, %v623
    %v627 = vrot.slane %v611, 2
    %v629 = vadd.f32 %v561, %v627
    %v630 = vlaneseq
    %v631 = vshrl.u32 %v630, 7
    %v632 = vsub.s32 1, %v631
    %v633 = vrot.slane %v512, %v632
    %634 = vrot.lane.b32.xlu0 %v633, 48
    %v635 = vpop.permute.xlu0 %634
    %vm636 = vcmask 392192
    %v637 = vsel %vm636, %v623, %v635
    %v639 = vadd.f32 %v629, %v637
    %v640 = vmul.f32 %v625, %v309
    %v641 = vxor.u32 %v640, 2147483648
    %v642 = vmul.f32 %v641, 1.442695
    %v643 = vpow.pop %v642
    %v644 = vadd.f32 %v643, 1.0
    %v645 = vrcp.pop %v644
    %v646 = vmul.f32 1.0, %v645
    %v647 = vmul.f32 %v639, %v309
    %v648 = vxor.u32 %v647, 2147483648
    %v649 = vmul.f32 %v648, 1.442695
    %v650 = vpow.pop %v649
    %v651 = vadd.f32 %v650, 1.0
    %v652 = vrcp.pop %v651
    %v653 = vmul.f32 1.0, %v652
    %v654 = vld [vmem:[%s4 + $0xc] sm:$0xf]
    %v655 = vld [vmem:[%s4 + $0x1c] sm:$0xf]
    %v656 = vld [vmem:[%s4 + $0x2c] sm:$0xf]
    %v657 = vld [vmem:[%s4 + $0x3c] sm:$0xf]
    %v658 = vld [vmem:[%s6 + $0x3] sm:$0x1]
    %v660 = vlaneseq
    %v661 = vshrl.u32 %v660, 7
    %v662 = vsub.s32 0, %v661
    %v663 = vrot.slane %v658, %v662
    %v668 = vunpack.c.l.b16 %v654
    %v669 = vunpack.c.l.b16 %v655
    %v670 = vunpack.c.l.b16 %v656
    %v671 = vunpack.c.l.b16 %v657
    %v672 = vpack.c.b16 %v669, %v668
    %v673 = vpack.c.b16 %v671, %v670
    %676 = vrot.lane.b32.xlu0 %v663, 112
    %v677 = vpop.permute.xlu0 %676
    %679 = vmatprep.subr.bf16.mxu0 0
    %680 = vmatpush1.bf16.msra.mxu0 %v672
    %681 = vmatprep.subr.bf16.mxu0 0
    %682 = vmatpush1.bf16.msra.mxu0 %v673
    %683 = vmatprep.subr.bf16.mxu0 0
    %684 = vmatpush1.bf16.msra.mxu0 0
    %685 = vmatprep.subr.bf16.mxu0 0
    %686 = vmatpush1.bf16.msra.mxu0 0
    %687 = vmatprep.subr.bf16.mxu0 0
    %688 = vmatpush1.bf16.msra.mxu0 0
    %689 = vmatprep.subr.bf16.mxu0 0
    %690 = vmatpush1.bf16.msra.mxu0 0
    %691 = vmatprep.subr.bf16.mxu0 0
    %692 = vmatpush1.bf16.msra.mxu0 0
    %693 = vmatprep.subr.bf16.mxu0 0
    %694 = vmatpush1.bf16.msra.mxu0 0
    %695 = vmatprep.subr.bf16.mxu0 0
    %696 = vmatpush1.bf16.msra.mxu0 0
    %697 = vmatprep.subr.bf16.mxu0 0
    %698 = vmatpush1.bf16.msra.mxu0 0
    %699 = vmatprep.subr.bf16.mxu0 0
    %700 = vmatpush1.bf16.msra.mxu0 0
    %701 = vmatprep.subr.bf16.mxu0 0
    %702 = vmatpush1.bf16.msra.mxu0 0
    %703 = vmatprep.subr.bf16.mxu0 0
    %704 = vmatpush1.bf16.msra.mxu0 0
    %705 = vmatprep.subr.bf16.mxu0 0
    %706 = vmatpush1.bf16.msra.mxu0 0
    %707 = vmatprep.subr.bf16.mxu0 0
    %708 = vmatpush1.bf16.msra.mxu0 0
    %709 = vmatprep.subr.bf16.mxu0 0
    %710 = vmatpush1.bf16.msra.mxu0 0
    %711 = vmatprep.mubr.bf16.mxu0 0
    %712 = vmatmul.mubr.bf16.gmra.mrb[0].mxu0 %v574
    %v713 = vpop.f32.mrb[0].mxu0
    %v714 = vadd.f32 %v677, %v713
    %v715 = vpop.f32.mrb[0].mxu0
    %v716 = vpop.f32.mrb[0].mxu0
    %v717 = vpop.f32.mrb[0].mxu0
    %718 = vdwg.mxu0
    %v719 = vxor.u32 %v714, 2147483648
    %v720 = vmul.f32 %v719, 1.442695
    %v721 = vpow.pop %v720
    %v722 = vadd.f32 %v721, 1.0
    %v723 = vrcp.pop %v722
    %v724 = vmul.f32 1.0, %v723
    %v725 = vld [vmem:[%s4] sm:$0xff]
    %v726 = vld [vmem:[%s4 + $0x10] sm:$0xff]
    %v727 = vld [vmem:[%s4 + $0x20] sm:$0xff]
    %v728 = vld [vmem:[%s4 + $0x30] sm:$0xff]
    %v729 = vld [vmem:[%s6] sm:$0x3]
    %v731 = vrot.slane %v646, 4
    %v734 = vrot.slane %v653, 2
    %735 = vrot.lane.b32.xlu0 %v734, 96
    %v736 = vpop.permute.xlu0 %735
    %vm738 = vcmask 1043456
    %v739 = vsel %vm738, %v316, %v731
    %vm740 = vcmask 1045504
    %v741 = vsel %vm740, %v739, %v736
    %v742 = vpack.c.bf16 %v741, %v741
    %v744 = vlaneseq
    %v745 = vshrl.u32 %v744, 7
    %v746 = vsub.s32 0, %v745
    %v747 = vrot.slane %v729, %v746
    %v748 = vlaneseq
    %v749 = vshrl.u32 %v748, 7
    %v750 = vsub.s32 1, %v749
    %v751 = vrot.slane %v729, %v750
    %v758 = vunpack.c.l.b16 %v725
    %v759 = vunpack.c.h.b16 %v725
    %v760 = vunpack.c.l.b16 %v726
    %v761 = vunpack.c.h.b16 %v726
    %v762 = vunpack.c.l.b16 %v727
    %v763 = vunpack.c.h.b16 %v727
    %v764 = vunpack.c.l.b16 %v728
    %v765 = vunpack.c.h.b16 %v728
    %v766 = vpack.c.b16 %v760, %v758
    %v767 = vpack.c.b16 %v761, %v759
    %v768 = vpack.c.b16 %v764, %v762
    %v769 = vpack.c.b16 %v765, %v763
    %v775 = vsel %vm340, %v742, 0
    %777 = vmatprep.subr.bf16.mxu0 %v767
    %778 = vmatpush1.bf16.msra.mxu0 %v766
    %779 = vmatprep.subr.bf16.mxu0 %v769
    %780 = vmatpush1.bf16.msra.mxu0 %v768
    %781 = vmatprep.subr.bf16.mxu0 0
    %782 = vmatpush1.bf16.msra.mxu0 0
    %783 = vmatprep.subr.bf16.mxu0 0
    %784 = vmatpush1.bf16.msra.mxu0 0
    %785 = vmatprep.subr.bf16.mxu0 0
    %786 = vmatpush1.bf16.msra.mxu0 0
    %787 = vmatprep.subr.bf16.mxu0 0
    %788 = vmatpush1.bf16.msra.mxu0 0
    %789 = vmatprep.subr.bf16.mxu0 0
    %790 = vmatpush1.bf16.msra.mxu0 0
    %791 = vmatprep.subr.bf16.mxu0 0
    %792 = vmatpush1.bf16.msra.mxu0 0
    %793 = vmatprep.subr.bf16.mxu0 0
    %794 = vmatpush1.bf16.msra.mxu0 0
    %795 = vmatprep.subr.bf16.mxu0 0
    %796 = vmatpush1.bf16.msra.mxu0 0
    %797 = vmatprep.subr.bf16.mxu0 0
    %798 = vmatpush1.bf16.msra.mxu0 0
    %799 = vmatprep.subr.bf16.mxu0 0
    %800 = vmatpush1.bf16.msra.mxu0 0
    %801 = vmatprep.subr.bf16.mxu0 0
    %802 = vmatpush1.bf16.msra.mxu0 0
    %803 = vmatprep.subr.bf16.mxu0 0
    %804 = vmatpush1.bf16.msra.mxu0 0
    %805 = vmatprep.subr.bf16.mxu0 0
    %806 = vmatpush1.bf16.msra.mxu0 0
    %807 = vmatprep.subr.bf16.mxu0 0
    %808 = vmatpush1.bf16.msra.mxu0 0
    %809 = vmatprep.mubr.bf16.mxu0 0
    %810 = vmatmul.mubr.bf16.gmra.mrb[0].mxu0 %v775
    %v811 = vpop.f32.mrb[0].mxu0
    %v812 = vadd.f32 %v747, %v811
    %v813 = vpop.f32.mrb[0].mxu0
    %v814 = vadd.f32 %v751, %v813
    %v815 = vpop.f32.mrb[0].mxu0
    %v816 = vpop.f32.mrb[0].mxu0
    %817 = vdwg.mxu0
    %v818 = vxor.u32 %v812, 2147483648
    %v819 = vxor.u32 %v814, 2147483648
    %v820 = vmul.f32 %v818, 1.442695
    %v821 = vpow.pop %v820
    %v822 = vmul.f32 %v819, 1.442695
    %v823 = vpow.pop %v822
    %v824 = vadd.f32 %v821, 1.0
    %v825 = vadd.f32 %v823, 1.0
    %v826 = vrcp.pop %v824
    %v827 = vmul.f32 1.0, %v826
    %v828 = vrcp.pop %v825
    %v829 = vmul.f32 1.0, %v828
    %830 = vst [vmem:[%s8] sm:$0xff] %v827
    %831 = vst [vmem:[%s8 + $0x8] sm:$0xff] %v829
    %v833 = vrot.slane %v308, 2
    %834 = vrot.lane.b32.xlu0 %v833, 32
    %v835 = vpop.permute.xlu0 %834
    %838 = vrot.lane.b32.xlu0 %v316, 64
    %v839 = vpop.permute.xlu0 %838
    %v841 = vrot.slane %v316, 2
    %842 = vrot.lane.b32.xlu0 %v841, 96
    %v843 = vpop.permute.xlu0 %842
    %845 = vrot.lane.b32.xlu0 %v646, 64
    %v846 = vpop.permute.xlu0 %845
    %848 = vrot.lane.b32.xlu0 %v653, 64
    %v849 = vpop.permute.xlu0 %848
    %852 = vrot.lane.b32.xlu0 %v509, 16
    %v853 = vpop.permute.xlu0 %852
    %856 = vrot.lane.b32.xlu0 %v724, 32
    %v857 = vpop.permute.xlu0 %856
    %v859 = vrot.slane %v724, 2
    %860 = vrot.lane.b32.xlu0 %v859, 32
    %v861 = vpop.permute.xlu0 %860
    %v863 = vsel %vm340, %v308, %v835
    %vm864 = vcmask 523264
    %v865 = vsel %vm864, %v863, %v839
    %vm866 = vcmask 785408
    %v867 = vsel %vm866, %v865, %v843
    %v868 = vsel %vm340, %v625, %v639
    %v869 = vsel %vm864, %v868, %v846
    %v870 = vsel %vm866, %v869, %v849
    %v871 = vsel %vm522, %v492, %v853
    %v872 = vsel %vm340, %v871, %v857
    %v873 = vsel %vm636, %v872, %v861
    %v874 = vsel %vm864, %v873, 0.0
    %v878 = vcombine.low %v867, %v870
    %v880 = vunpack.c.l.s4 1983009808
    %v881 = vunpack.c.0.s8 %v880
    %v882 = vlaneseq
    %v883 = vshrl.u32 %v882, 7
    %v884 = vsub.s32 %v881, %v883
    %v885 = vrot.slane %v878, %v884
    %v887 = vunpack.c.l.s4 1983009808
    %v888 = vunpack.c.0.s8 %v887
    %v889 = vlaneseq
    %v890 = vshrl.u32 %v889, 7
    %v891 = vsub.s32 %v888, %v890
    %v892 = vrot.slane %v874, %v891
    %v893 = vcombine.low %v885, %v892
    %895 = vst [vmem:[%s7] sm:$0x3f] %v893
    // Predicated region
    $region34: #{forward.1} parent=1 // pred_check
      _
    $region35: #{forward.1} parent=1 // pred_check_branch
      %897 = sbr.rel (0) target = $region37
    $region36: #{forward.1} parent=1 // pred_region
      _
    $region37: #{forward.1} parent=1 // pred_fallthru
      _
    // Predicated region
    $region38: #{forward.1} parent=1 // pred_check
      _
    $region39: #{forward.1} parent=1 // pred_check_branch
      %899 = sbr.rel (0) target = $region41
    $region40: #{forward.1} parent=1 // pred_region
      _
    $region41: #{forward.1} parent=1 // pred_fallthru
      _
    // Predicated region
    $region42: #{forward.1} parent=1 // pred_check
      _
    $region43: #{forward.1} parent=1 // pred_check_branch
      %901 = sbr.rel (0) target = $region45
    $region44: #{forward.1} parent=1 // pred_region
      _
    $region45: #{forward.1} parent=1 // pred_fallthru
      _
    // Predicated region
    $region46: #{forward.1} parent=1 // pred_check
      _
    $region47: #{forward.1} parent=1 // pred_check_branch
      %903 = sbr.rel (0) target = $region49
    $region48: #{forward.1} parent=1 // pred_region
      _
    $region49: #{forward.1} parent=1 // pred_fallthru
      _
    %904 = vsyncpa [#allocation4], 1

</llo_original>
